<compile_context>
chip_gen: v7x
topology: tpu7x:2x2x1
jax: 0.10.0
libtpu: 0.0.40
codegen_flags: <defaults>
</compile_context>

<pallas_src>
import numpy as np
import jax
import jax.numpy as jnp
from jax.experimental import pallas as pl
from jax.experimental.pallas import tpu as pltpu


# ------------------------------ small helpers ------------------------------ #

def _round_up(a, b):
    return (a + b - 1) // b * b


def _shift_with_zeros(x, delta):
    """y[:, j] = x[:, j + delta] if 0 <= j + delta < L else 0 (static delta)."""
    bb, ll = x.shape
    if delta == 0:
        return x
    if abs(delta) >= ll:
        return jnp.zeros_like(x)
    pad = jnp.zeros((bb, abs(delta)), x.dtype)
    if delta > 0:
        return jnp.concatenate([x[:, delta:], pad], axis=1)
    return jnp.concatenate([pad, x[:, :delta]], axis=1)


def _decimation_matrix(L, step):
    """[L, L//step] 0/1 matrix S with S[j, o] = 1 iff j == step * o."""
    rows = jax.lax.broadcasted_iota(jnp.int32, (L, L // step), 0)
    cols = jax.lax.broadcasted_iota(jnp.int32, (L, L // step), 1)
    return jnp.where(rows == cols * step, 1.0, 0.0).astype(jnp.float32)


# ------------------------------ Pallas kernel ------------------------------ #

def _make_wavelet_kernel(num_levels, seq_len, level_params):
    """Fused multi-level wavelet decomposition (a-trous / dilated formulation).

    PyTorch Conv1d(1,1,k=4,s=2,p=1) semantics per level:
        out[o] = b + w0*s[2o-1] + w1*s[2o] + w2*s[2o+1] + w3*s[2o+2],  s[-1]=s[len]=0
    Carrying the low band at FULL rate, level `i` becomes a dilation-2**i FIR on a
    [B_blk, L] tile; the true band values live at positions j = 2**(i+1) * m and are
    extracted exactly with a 0/1 selection matmul (idle MXU), which also yields the
    batch-major layout needed for a dense store.
    """
    n = num_levels
    L = seq_len

    def kernel(x_ref, *out_refs):
        f = x_ref[...]                                   # [B_blk, L] full-rate signal
        for lvl in range(n):
            wl, bl, wh, bh = level_params[lvl]           # compile-time constants
            dil = 1 << lvl
            # Accumulate taps one at a time -> only ~4 full-rate temps live at once.
            low = wl[1] * f + bl
            high = wh[1] * f + bh
            t = _shift_with_zeros(f, -dil)               # s[2o-1] tap
            low = low + wl[0] * t
            high = high + wh[0] * t
            t = _shift_with_zeros(f, dil)                # s[2o+1] tap
            low = low + wl[2] * t
            high = high + wh[2] * t
            t = _shift_with_zeros(f, 2 * dil)            # s[2o+2] tap
            low = low + wl[3] * t
            high = high + wh[3] * t
            # Exact stride-2**(lvl+1) decimation of the high band on the MXU;
            # output is [B_blk, L >> (lvl+1)], batch-major, natural time order.
            sel = _decimation_matrix(L, 2 * dil)
            out_refs[lvl][...] = jax.lax.dot_general(
                high, sel, (((1,), (0,)), ((), ())),
                precision=jax.lax.Precision.HIGHEST,
                preferred_element_type=jnp.float32)
            f = low                                      # carry low band at full rate
        # Final low band.
        sel = _decimation_matrix(L, 1 << n)
        out_refs[n][...] = jax.lax.dot_general(
            f, sel, (((1,), (0,)), ((), ())),
            precision=jax.lax.Precision.HIGHEST,
            preferred_element_type=jnp.float32)

    return kernel


# ------------------------------ module wrapper ------------------------------ #

class WaveletDecompositionPallas:
    """Pallas equivalent of the PyTorch WaveletDecomposition module."""

    def __init__(self, seq_len, num_levels=3, key=None):
        self.seq_len = seq_len
        self.num_levels = num_levels
        key = jax.random.PRNGKey(42) if key is None else key
        keys = jax.random.split(key, num_levels * 6)
        bound = 1.0 / np.sqrt(4.0)   # torch Conv1d default init bound, fan_in = 1*4

        self.low_w, self.low_b = [], []
        self.high_w, self.high_b = [], []
        # ConvTranspose1d "reconstruction" params exist in __init__ but are never
        # used in forward(); kept only for parameter parity.
        self.recon_w, self.recon_b = [], []

        idx = 0
        for _ in range(num_levels):
            self.low_w.append(np.asarray(jax.random.uniform(keys[idx], (4,), jnp.float32, -bound, bound))); idx += 1
            self.low_b.append(float(jax.random.uniform(keys[idx], (), jnp.float32, -bound, bound))); idx += 1
            self.high_w.append(np.asarray(jax.random.uniform(keys[idx], (4,), jnp.float32, -bound, bound))); idx += 1
            self.high_b.append(float(jax.random.uniform(keys[idx], (), jnp.float32, -bound, bound))); idx += 1
            self.recon_w.append(np.asarray(jax.random.uniform(keys[idx], (4,), jnp.float32, -bound, bound))); idx += 1
            self.recon_b.append(float(jax.random.uniform(keys[idx], (), jnp.float32, -bound, bound))); idx += 1

        # Bake taps + biases as compile-time Python constants (review item 10).
        self._level_params = tuple(
            (tuple(float(v) for v in self.low_w[i]), float(self.low_b[i]),
             tuple(float(v) for v in self.high_w[i]), float(self.high_b[i]))
            for i in range(num_levels))

        self._fwd = jax.jit(self._forward_impl)

    # --- batch-block planning (review items 5/6/7/8) --- #
    def _plan_batch_tiling(self, B, L):
        B8 = _round_up(max(B, 1), 8)
        # VMEM per block ~ 2x in-buf + 2x out-bufs + ~6 live full-rate temps (f32)
        # plus the 0/1 decimation constants; keep under a conservative budget that
        # fits every generation's scoped VMEM (v5e 16 MiB default, v7x 64 MiB phys).
        budget = 12 * 1024 * 1024
        sel_bytes = 4 * L * L
        per_row = 10 * L * 4
        if budget > sel_bytes + 8 * per_row:
            cap = (budget - sel_bytes) // per_row
        else:
            cap = 8
        cap = max(8, (cap // 8) * 8)
        b_blk = min(512, B8, cap)
        if B8 >= 128 and pl.cdiv(B8, b_blk) < 2:
            # >= 2 batch blocks so the "parallel" grid axis can shard across
            # TensorCores (v7x has 2 TCs per chip).
            b_blk = min(b_blk, max(8, _round_up(pl.cdiv(B8, 2), 8)))
        n_blk = pl.cdiv(B8, b_blk)
        return b_blk, n_blk * b_blk, n_blk

    def _forward_impl(self, x):
        B, L, C = x.shape
        n = self.num_levels
        assert L == self.seq_len
        # TODO(synk): seq_len not divisible by 2**num_levels needs per-level odd-length
        # boundary handling; the fused a-trous formulation assumes exact divisibility.
        assert L % (2 ** n) == 0, "seq_len must be divisible by 2**num_levels"

        # Target = last channel.
        # TODO(synk): review item 11 (select the channel inside the input BlockSpec via a
        # trailing squeezed block dim + index_map (i, 0, C-1)) is left in the wrapper: the
        # element-strided DMA / trailing size-1 minor block dim could not be verified to
        # lower efficiently on all generations, so it stays one XLA slice here.
        target = x[:, :, -1].astype(jnp.float32)                       # [B, L]

        b_blk, b_pad, n_blk = self._plan_batch_tiling(B, L)
        if b_pad != B:
            target = jnp.pad(target, ((0, b_pad - B), (0, 0)))

        band_lens = [L >> (i + 1) for i in range(n)] + [L >> n]
        kernel = _make_wavelet_kernel(n, L, self._level_params)

        outs = pl.pallas_call(
            kernel,
            grid=(n_blk,),
            in_specs=[pl.BlockSpec((b_blk, L), lambda i: (i, 0))],
            out_specs=tuple(pl.BlockSpec((b_blk, w), lambda i: (i, 0)) for w in band_lens),
            out_shape=tuple(jax.ShapeDtypeStruct((b_pad, w), jnp.float32) for w in band_lens),
            compiler_params=pltpu.CompilerParams(
                dimension_semantics=("parallel",),
                vmem_limit_bytes=32 * 1024 * 1024),
        )(target)

        # [B, L_i] -> [B, 1, L_i]; free reshape -- bands are already batch-major and in
        # natural time order, so no un-permute / re-pack pass is needed.
        return [o[:B, None, :] for o in outs]

    def forward(self, x):
        return self._fwd(x)

    __call__ = forward


# --------------------------------- reference -------------------------------- #

def _ref_conv1d(x, w, b):
    """numpy reference of Conv1d(1,1,k=4,s=2,p=1) on [B, L]."""
    B, L = x.shape
    lout = (L + 2 - 4) // 2 + 1
    xp = np.pad(x, ((0, 0), (1, 1)))
    out = np.zeros((B, lout), np.float32)
    for o in range(lout):
        out[:, o] = xp[:, 2 * o:2 * o + 4] @ np.asarray(w, np.float32) + float(b)
    return out


def _ref_forward(x_np, mod):
    cur = x_np[:, :, -1].astype(np.float32)
    comps = []
    for i in range(mod.num_levels):
        low = _ref_conv1d(cur, mod.low_w[i], mod.low_b[i])
        high = _ref_conv1d(cur, mod.high_w[i], mod.high_b[i])
        comps.append(high[:, None, :])
        cur = low
    comps.append(cur[:, None, :])
    return comps


# ----------------------------------- main ----------------------------------- #

if __name__ == "__main__":
    B, L, C = 2, 16, 4
    num_levels = 3

    x = jax.random.normal(jax.random.PRNGKey(0), (B, L, C), dtype=jnp.float32)

    mod = WaveletDecompositionPallas(seq_len=L, num_levels=num_levels)
    comps = mod.forward(x)
    comps = [jax.block_until_ready(c) for c in comps]

    # Shape check (matches PyTorch: [B,1,8], [B,1,4], [B,1,2], [B,1,2]).
    expected_shapes = [(B, 1, 8), (B, 1, 4), (B, 1, 2), (B, 1, 2)]
    assert [tuple(c.shape) for c in comps] == expected_shapes, \
        f"got {[tuple(c.shape) for c in comps]}"

    # Numerical check against a plain numpy reference of the torch semantics.
    ref = _ref_forward(np.asarray(x), mod)
    for got, exp in zip(comps, ref):
        np.testing.assert_allclose(np.asarray(got), exp, rtol=5e-4, atol=1e-5)

    print("KERNEL_OK")
</pallas_src>

<mosaic_0001>
module attributes {stable_mosaic.version = 11 : i64} {
  func.func @kernel(%arg0: i32, %arg1: memref<8x16xf32, #tpu.memory_space<vmem>>, %arg2: memref<8x8xf32, #tpu.memory_space<vmem>>, %arg3: memref<8x4xf32, #tpu.memory_space<vmem>>, %arg4: memref<8x2xf32, #tpu.memory_space<vmem>>, %arg5: memref<8x2xf32, #tpu.memory_space<vmem>>) attributes {dimension_semantics = [#tpu.dimension_semantics<parallel>], iteration_bounds = array<i64: 1>, scalar_prefetch = 0 : i64, scratch_operands = 0 : i64, tpu.core_type = #tpu.core_type<tc>, window_params = [{transform_indices = @transform_0, window_bounds = array<i64: 8, 16>}, {transform_indices = @transform_1, window_bounds = array<i64: 8, 8>}, {transform_indices = @transform_2, window_bounds = array<i64: 8, 4>}, {transform_indices = @transform_3, window_bounds = array<i64: 8, 2>}, {transform_indices = @transform_4, window_bounds = array<i64: 8, 2>}]} {
    %c0 = arith.constant 0 : index
    %c0_0 = arith.constant 0 : index
    %0 = vector.load %arg1[%c0, %c0_0] : memref<8x16xf32, #tpu.memory_space<vmem>>, vector<8x16xf32>
    %cst = arith.constant -0.186637878 : f32
    %1 = vector.broadcast %cst : f32 to vector<8x16xf32>
    %2 = arith.mulf %1, %0 : vector<8x16xf32>
    %cst_1 = arith.constant 0.227664232 : f32
    %3 = vector.broadcast %cst_1 : f32 to vector<8x16xf32>
    %4 = arith.addf %2, %3 : vector<8x16xf32>
    %cst_2 = arith.constant 0.221486688 : f32
    %5 = vector.broadcast %cst_2 : f32 to vector<8x16xf32>
    %6 = arith.mulf %5, %0 : vector<8x16xf32>
    %cst_3 = arith.constant -0.110987902 : f32
    %7 = vector.broadcast %cst_3 : f32 to vector<8x16xf32>
    %8 = arith.addf %6, %7 : vector<8x16xf32>
    %cst_4 = arith.constant 0.000000e+00 : f32
    %9 = vector.broadcast %cst_4 : f32 to vector<8x1xf32>
    %10 = vector.extract_strided_slice %0 {offsets = [0, 0], sizes = [8, 15], strides = [1, 1]} : vector<8x16xf32> to vector<8x15xf32>
    %11 = tpu.concatenate %9, %10 in 1 : vector<8x1xf32>, vector<8x15xf32> -> vector<8x16xf32>
    %cst_5 = arith.constant 0.0302608013 : f32
    %12 = vector.broadcast %cst_5 : f32 to vector<8x16xf32>
    %13 = arith.mulf %12, %11 : vector<8x16xf32>
    %14 = arith.addf %4, %13 : vector<8x16xf32>
    %cst_6 = arith.constant 0.16724062 : f32
    %15 = vector.broadcast %cst_6 : f32 to vector<8x16xf32>
    %16 = arith.mulf %15, %11 : vector<8x16xf32>
    %17 = arith.addf %8, %16 : vector<8x16xf32>
    %cst_7 = arith.constant 0.000000e+00 : f32
    %18 = vector.broadcast %cst_7 : f32 to vector<8x1xf32>
    %19 = vector.extract_strided_slice %0 {offsets = [0, 1], sizes = [8, 15], strides = [1, 1]} : vector<8x16xf32> to vector<8x15xf32>
    %20 = tpu.concatenate %19, %18 in 1 : vector<8x15xf32>, vector<8x1xf32> -> vector<8x16xf32>
    %cst_8 = arith.constant 0.401530266 : f32
    %21 = vector.broadcast %cst_8 : f32 to vector<8x16xf32>
    %22 = arith.mulf %21, %20 : vector<8x16xf32>
    %23 = arith.addf %14, %22 : vector<8x16xf32>
    %cst_9 = arith.constant -0.373205304 : f32
    %24 = vector.broadcast %cst_9 : f32 to vector<8x16xf32>
    %25 = arith.mulf %24, %20 : vector<8x16xf32>
    %26 = arith.addf %17, %25 : vector<8x16xf32>
    %cst_10 = arith.constant 0.000000e+00 : f32
    %27 = vector.broadcast %cst_10 : f32 to vector<8x2xf32>
    %28 = vector.extract_strided_slice %0 {offsets = [0, 2], sizes = [8, 14], strides = [1, 1]} : vector<8x16xf32> to vector<8x14xf32>
    %29 = tpu.concatenate %28, %27 in 1 : vector<8x14xf32>, vector<8x2xf32> -> vector<8x16xf32>
    %cst_11 = arith.constant 0.198332906 : f32
    %30 = vector.broadcast %cst_11 : f32 to vector<8x16xf32>
    %31 = arith.mulf %30, %29 : vector<8x16xf32>
    %32 = arith.addf %23, %31 : vector<8x16xf32>
    %cst_12 = arith.constant -0.145723104 : f32
    %33 = vector.broadcast %cst_12 : f32 to vector<8x16xf32>
    %34 = arith.mulf %33, %29 : vector<8x16xf32>
    %35 = arith.addf %26, %34 : vector<8x16xf32>
    %36 = tpu.iota {dimensions = array<i32: 0>} : vector<16x8xi32>
    %37 = tpu.iota {dimensions = array<i32: 1>} : vector<16x8xi32>
    %c2_i32 = arith.constant 2 : i32
    %38 = vector.broadcast %c2_i32 : i32 to vector<16x8xi32>
    %39 = arith.muli %37, %38 : vector<16x8xi32>
    %40 = arith.cmpi eq, %36, %39 : vector<16x8xi32>
    %cst_13 = arith.constant 1.000000e+00 : f32
    %cst_14 = arith.constant 0.000000e+00 : f32
    %41 = vector.broadcast %cst_13 : f32 to vector<16x8xf32>
    %42 = vector.broadcast %cst_14 : f32 to vector<16x8xf32>
    %43 = arith.select %40, %41, %42 : vector<16x8xi1>, vector<16x8xf32>
    %cst_15 = arith.constant dense<0.000000e+00> : vector<8x8xf32>
    %44 = tpu.matmul %35, %43, %cst_15 {dimension_numbers = #tpu.dot_dimension_numbers<[1], [0], [0], [1], [0, 0, 1, 1], [], []>, precision = #tpu.contract_precision<fp32>} : vector<8x16xf32>, vector<16x8xf32>, vector<8x8xf32> -> vector<8x8xf32>
    %c0_16 = arith.constant 0 : index
    %c0_17 = arith.constant 0 : index
    %45 = vector.load %arg2[%c0_16, %c0_17] : memref<8x8xf32, #tpu.memory_space<vmem>>, vector<8x8xf32>
    tpu.vector_store %arg2[%c0_16, %c0_17], %44 {strides = array<i32>} : memref<8x8xf32, #tpu.memory_space<vmem>>, vector<8x8xf32>,
    %cst_18 = arith.constant -0.238456368 : f32
    %46 = vector.broadcast %cst_18 : f32 to vector<8x16xf32>
    %47 = arith.mulf %46, %32 : vector<8x16xf32>
    %cst_19 = arith.constant 0.113571405 : f32
    %48 = vector.broadcast %cst_19 : f32 to vector<8x16xf32>
    %49 = arith.addf %47, %48 : vector<8x16xf32>
    %cst_20 = arith.constant -0.0606528521 : f32
    %50 = vector.broadcast %cst_20 : f32 to vector<8x16xf32>
    %51 = arith.mulf %50, %32 : vector<8x16xf32>
    %cst_21 = arith.constant -0.41089046 : f32
    %52 = vector.broadcast %cst_21 : f32 to vector<8x16xf32>
    %53 = arith.addf %51, %52 : vector<8x16xf32>
    %cst_22 = arith.constant 0.000000e+00 : f32
    %54 = vector.broadcast %cst_22 : f32 to vector<8x2xf32>
    %55 = vector.extract_strided_slice %32 {offsets = [0, 0], sizes = [8, 14], strides = [1, 1]} : vector<8x16xf32> to vector<8x14xf32>
    %56 = tpu.concatenate %54, %55 in 1 : vector<8x2xf32>, vector<8x14xf32> -> vector<8x16xf32>
    %cst_23 = arith.constant -0.100408196 : f32
    %57 = vector.broadcast %cst_23 : f32 to vector<8x16xf32>
    %58 = arith.mulf %57, %56 : vector<8x16xf32>
    %59 = arith.addf %49, %58 : vector<8x16xf32>
    %cst_24 = arith.constant 0.0571894646 : f32
    %60 = vector.broadcast %cst_24 : f32 to vector<8x16xf32>
    %61 = arith.mulf %60, %56 : vector<8x16xf32>
    %62 = arith.addf %53, %61 : vector<8x16xf32>
    %cst_25 = arith.constant 0.000000e+00 : f32
    %63 = vector.broadcast %cst_25 : f32 to vector<8x2xf32>
    %64 = vector.extract_strided_slice %32 {offsets = [0, 2], sizes = [8, 14], strides = [1, 1]} : vector<8x16xf32> to vector<8x14xf32>
    %65 = tpu.concatenate %64, %63 in 1 : vector<8x14xf32>, vector<8x2xf32> -> vector<8x16xf32>
    %cst_26 = arith.constant -2.533970e-01 : f32
    %66 = vector.broadcast %cst_26 : f32 to vector<8x16xf32>
    %67 = arith.mulf %66, %65 : vector<8x16xf32>
    %68 = arith.addf %59, %67 : vector<8x16xf32>
    %cst_27 = arith.constant -0.463986158 : f32
    %69 = vector.broadcast %cst_27 : f32 to vector<8x16xf32>
    %70 = arith.mulf %69, %65 : vector<8x16xf32>
    %71 = arith.addf %62, %70 : vector<8x16xf32>
    %cst_28 = arith.constant 0.000000e+00 : f32
    %72 = vector.broadcast %cst_28 : f32 to vector<8x4xf32>
    %73 = vector.extract_strided_slice %32 {offsets = [0, 4], sizes = [8, 12], strides = [1, 1]} : vector<8x16xf32> to vector<8x12xf32>
    %74 = tpu.concatenate %73, %72 in 1 : vector<8x12xf32>, vector<8x4xf32> -> vector<8x16xf32>
    %cst_29 = arith.constant 0.0223886967 : f32
    %75 = vector.broadcast %cst_29 : f32 to vector<8x16xf32>
    %76 = arith.mulf %75, %74 : vector<8x16xf32>
    %77 = arith.addf %68, %76 : vector<8x16xf32>
    %cst_30 = arith.constant 0.207351446 : f32
    %78 = vector.broadcast %cst_30 : f32 to vector<8x16xf32>
    %79 = arith.mulf %78, %74 : vector<8x16xf32>
    %80 = arith.addf %71, %79 : vector<8x16xf32>
    %81 = tpu.iota {dimensions = array<i32: 0>} : vector<16x4xi32>
    %82 = tpu.iota {dimensions = array<i32: 1>} : vector<16x4xi32>
    %c4_i32 = arith.constant 4 : i32
    %83 = vector.broadcast %c4_i32 : i32 to vector<16x4xi32>
    %84 = arith.muli %82, %83 : vector<16x4xi32>
    %85 = arith.cmpi eq, %81, %84 : vector<16x4xi32>
    %cst_31 = arith.constant 1.000000e+00 : f32
    %cst_32 = arith.constant 0.000000e+00 : f32
    %86 = vector.broadcast %cst_31 : f32 to vector<16x4xf32>
    %87 = vector.broadcast %cst_32 : f32 to vector<16x4xf32>
    %88 = arith.select %85, %86, %87 : vector<16x4xi1>, vector<16x4xf32>
    %cst_33 = arith.constant dense<0.000000e+00> : vector<8x4xf32>
    %89 = tpu.matmul %80, %88, %cst_33 {dimension_numbers = #tpu.dot_dimension_numbers<[1], [0], [0], [1], [0, 0, 1, 1], [], []>, precision = #tpu.contract_precision<fp32>} : vector<8x16xf32>, vector<16x4xf32>, vector<8x4xf32> -> vector<8x4xf32>
    %c0_34 = arith.constant 0 : index
    %c0_35 = arith.constant 0 : index
    %90 = vector.load %arg3[%c0_34, %c0_35] : memref<8x4xf32, #tpu.memory_space<vmem>>, vector<8x4xf32>
    tpu.vector_store %arg3[%c0_34, %c0_35], %89 {strides = array<i32>} : memref<8x4xf32, #tpu.memory_space<vmem>>, vector<8x4xf32>,
    %cst_36 = arith.constant -0.391982913 : f32
    %91 = vector.broadcast %cst_36 : f32 to vector<8x16xf32>
    %92 = arith.mulf %91, %77 : vector<8x16xf32>
    %cst_37 = arith.constant 0.253329515 : f32
    %93 = vector.broadcast %cst_37 : f32 to vector<8x16xf32>
    %94 = arith.addf %92, %93 : vector<8x16xf32>
    %cst_38 = arith.constant -0.0550365448 : f32
    %95 = vector.broadcast %cst_38 : f32 to vector<8x16xf32>
    %96 = arith.mulf %95, %77 : vector<8x16xf32>
    %cst_39 = arith.constant -0.105764985 : f32
    %97 = vector.broadcast %cst_39 : f32 to vector<8x16xf32>
    %98 = arith.addf %96, %97 : vector<8x16xf32>
    %cst_40 = arith.constant 0.000000e+00 : f32
    %99 = vector.broadcast %cst_40 : f32 to vector<8x4xf32>
    %100 = vector.extract_strided_slice %77 {offsets = [0, 0], sizes = [8, 12], strides = [1, 1]} : vector<8x16xf32> to vector<8x12xf32>
    %101 = tpu.concatenate %99, %100 in 1 : vector<8x4xf32>, vector<8x12xf32> -> vector<8x16xf32>
    %cst_41 = arith.constant -0.335123062 : f32
    %102 = vector.broadcast %cst_41 : f32 to vector<8x16xf32>
    %103 = arith.mulf %102, %101 : vector<8x16xf32>
    %104 = arith.addf %94, %103 : vector<8x16xf32>
    %cst_42 = arith.constant -0.47287488 : f32
    %105 = vector.broadcast %cst_42 : f32 to vector<8x16xf32>
    %106 = arith.mulf %105, %101 : vector<8x16xf32>
    %107 = arith.addf %98, %106 : vector<8x16xf32>
    %cst_43 = arith.constant 0.000000e+00 : f32
    %108 = vector.broadcast %cst_43 : f32 to vector<8x4xf32>
    %109 = vector.extract_strided_slice %77 {offsets = [0, 4], sizes = [8, 12], strides = [1, 1]} : vector<8x16xf32> to vector<8x12xf32>
    %110 = tpu.concatenate %109, %108 in 1 : vector<8x12xf32>, vector<8x4xf32> -> vector<8x16xf32>
    %cst_44 = arith.constant 0.295917034 : f32
    %111 = vector.broadcast %cst_44 : f32 to vector<8x16xf32>
    %112 = arith.mulf %111, %110 : vector<8x16xf32>
    %113 = arith.addf %104, %112 : vector<8x16xf32>
    %cst_45 = arith.constant 0.229259729 : f32
    %114 = vector.broadcast %cst_45 : f32 to vector<8x16xf32>
    %115 = arith.mulf %114, %110 : vector<8x16xf32>
    %116 = arith.addf %107, %115 : vector<8x16xf32>
    %cst_46 = arith.constant 0.000000e+00 : f32
    %117 = vector.broadcast %cst_46 : f32 to vector<8x8xf32>
    %118 = vector.extract_strided_slice %77 {offsets = [0, 8], sizes = [8, 8], strides = [1, 1]} : vector<8x16xf32> to vector<8x8xf32>
    %119 = tpu.concatenate %118, %117 in 1 : vector<8x8xf32>, vector<8x8xf32> -> vector<8x16xf32>
    %cst_47 = arith.constant -0.421669245 : f32
    %120 = vector.broadcast %cst_47 : f32 to vector<8x16xf32>
    %121 = arith.mulf %120, %119 : vector<8x16xf32>
    %122 = arith.addf %113, %121 : vector<8x16xf32>
    %cst_48 = arith.constant -0.319333434 : f32
    %123 = vector.broadcast %cst_48 : f32 to vector<8x16xf32>
    %124 = arith.mulf %123, %119 : vector<8x16xf32>
    %125 = arith.addf %116, %124 : vector<8x16xf32>
    %126 = tpu.iota {dimensions = array<i32: 0>} : vector<16x2xi32>
    %127 = tpu.iota {dimensions = array<i32: 1>} : vector<16x2xi32>
    %c8_i32 = arith.constant 8 : i32
    %128 = vector.broadcast %c8_i32 : i32 to vector<16x2xi32>
    %129 = arith.muli %127, %128 : vector<16x2xi32>
    %130 = arith.cmpi eq, %126, %129 : vector<16x2xi32>
    %cst_49 = arith.constant 1.000000e+00 : f32
    %cst_50 = arith.constant 0.000000e+00 : f32
    %131 = vector.broadcast %cst_49 : f32 to vector<16x2xf32>
    %132 = vector.broadcast %cst_50 : f32 to vector<16x2xf32>
    %133 = arith.select %130, %131, %132 : vector<16x2xi1>, vector<16x2xf32>
    %cst_51 = arith.constant dense<0.000000e+00> : vector<8x2xf32>
    %134 = tpu.matmul %125, %133, %cst_51 {dimension_numbers = #tpu.dot_dimension_numbers<[1], [0], [0], [1], [0, 0, 1, 1], [], []>, precision = #tpu.contract_precision<fp32>} : vector<8x16xf32>, vector<16x2xf32>, vector<8x2xf32> -> vector<8x2xf32>
    %c0_52 = arith.constant 0 : index
    %c0_53 = arith.constant 0 : index
    %135 = vector.load %arg4[%c0_52, %c0_53] : memref<8x2xf32, #tpu.memory_space<vmem>>, vector<8x2xf32>
    tpu.vector_store %arg4[%c0_52, %c0_53], %134 {strides = array<i32>} : memref<8x2xf32, #tpu.memory_space<vmem>>, vector<8x2xf32>,
    %136 = tpu.iota {dimensions = array<i32: 0>} : vector<16x2xi32>
    %137 = tpu.iota {dimensions = array<i32: 1>} : vector<16x2xi32>
    %c8_i32_54 = arith.constant 8 : i32
    %138 = vector.broadcast %c8_i32_54 : i32 to vector<16x2xi32>
    %139 = arith.muli %137, %138 : vector<16x2xi32>
    %140 = arith.cmpi eq, %136, %139 : vector<16x2xi32>
    %cst_55 = arith.constant 1.000000e+00 : f32
    %cst_56 = arith.constant 0.000000e+00 : f32
    %141 = vector.broadcast %cst_55 : f32 to vector<16x2xf32>
    %142 = vector.broadcast %cst_56 : f32 to vector<16x2xf32>
    %143 = arith.select %140, %141, %142 : vector<16x2xi1>, vector<16x2xf32>
    %cst_57 = arith.constant dense<0.000000e+00> : vector<8x2xf32>
    %144 = tpu.matmul %122, %143, %cst_57 {dimension_numbers = #tpu.dot_dimension_numbers<[1], [0], [0], [1], [0, 0, 1, 1], [], []>, precision = #tpu.contract_precision<fp32>} : vector<8x16xf32>, vector<16x2xf32>, vector<8x2xf32> -> vector<8x2xf32>
    %c0_58 = arith.constant 0 : index
    %c0_59 = arith.constant 0 : index
    %145 = vector.load %arg5[%c0_58, %c0_59] : memref<8x2xf32, #tpu.memory_space<vmem>>, vector<8x2xf32>
    tpu.vector_store %arg5[%c0_58, %c0_59], %144 {strides = array<i32>} : memref<8x2xf32, #tpu.memory_space<vmem>>, vector<8x2xf32>,
    return
  }
  func.func @transform_0(%arg0: i32) -> (i32, i32) {
    %c0_i32 = arith.constant 0 : i32
    %c0_i32_0 = arith.constant 0 : i32
    return %arg0, %c0_i32 : i32, i32
  }
  func.func @transform_1(%arg0: i32) -> (i32, i32) {
    %c0_i32 = arith.constant 0 : i32
    %c0_i32_0 = arith.constant 0 : i32
    return %arg0, %c0_i32 : i32, i32
  }
  func.func @transform_2(%arg0: i32) -> (i32, i32) {
    %c0_i32 = arith.constant 0 : i32
    %c0_i32_0 = arith.constant 0 : i32
    return %arg0, %c0_i32 : i32, i32
  }
  func.func @transform_3(%arg0: i32) -> (i32, i32) {
    %c0_i32 = arith.constant 0 : i32
    %c0_i32_0 = arith.constant 0 : i32
    return %arg0, %c0_i32 : i32, i32
  }
  func.func @transform_4(%arg0: i32) -> (i32, i32) {
    %c0_i32 = arith.constant 0 : i32
    %c0_i32_0 = arith.constant 0 : i32
    return %arg0, %c0_i32 : i32, i32
  }
}

</mosaic_0001>

<llo_original>
// kernel: _forward_impl.1
$region0: #{_forward_impl.1}
  #allocation0 [shape = 'u32[]', space=smem, size = 0x4, offset = 0x4, fixed_abs, tag = 'smem constant byte address 0x4 - core index']
  #allocation1 [shape = 'u32[144,128]{1,0:T(1,128)}', space=vmem, size = 0x12000, scoped, tag = 'internal scratch']
  %s0 = inlined_call_operand.vmem [shape: f32[8,16], index: 0, kind: input, shape index: {}]
  %s1 = inlined_call_operand.vmem [shape: f32[8,8], index: 1, kind: output, shape index: {0}]
  %s2 = inlined_call_operand.vmem [shape: f32[8,4], index: 2, kind: output, shape index: {1}]
  %s3 = inlined_call_operand.vmem [shape: f32[8,2], index: 3, kind: output, shape index: {2}]
  %s4 = inlined_call_operand.vmem [shape: f32[8,2], index: 4, kind: output, shape index: {3}]
  %5 = xla_tuple %s1, %s2, %s3, %s4
  %s6 = sld [smem:[#allocation0]]
  $region38: #{_forward_impl.1} parent=0
    _
  %s8 = ssub.s32 1, %s6
  %s9 = scalar_select 0, %s8, %s6
  // Predicated region
  $region2: #{_forward_impl.1} parent=0 // pred_check
    _
  $region3: #{_forward_impl.1} parent=0 // pred_check_branch
    %11 = sbr.rel (0) target = $region5
  $region4: #{_forward_impl.1} parent=0 // pred_region
    _
  $region5: #{_forward_impl.1} parent=0 // pred_fallthru
    _
  %v12 = vld [vmem:[%s0] sm:$0xff]
  %v13 = vmul.f32 %v12, -0.18663788
  %v14 = vadd.f32 %v13, 0.22766423
  %v15 = vmul.f32 %v12, 0.22148669
  %v16 = vadd.f32 %v15, -0.1109879
  %18 = vrot.lane.b32.xlu0 %v12, 1
  %v19 = vpop.permute.xlu0 %18
  %vm21 = vcmask 7168
  %v22 = vsel %vm21, 0.0, %v19
  %v23 = vmul.f32 %v22, 0.030260801
  %v24 = vadd.f32 %v14, %v23
  %v25 = vmul.f32 %v22, 0.16724062
  %v26 = vadd.f32 %v16, %v25
  %27 = vrot.lane.b32.xlu0 %v12, 127
  %v28 = vpop.permute.xlu0 %27
  %vm30 = vcmask 121856
  %v31 = vsel %vm30, %v28, 0.0
  %v32 = vmul.f32 %v31, 0.40153027
  %v33 = vadd.f32 %v24, %v32
  %v34 = vmul.f32 %v31, -0.3732053
  %v35 = vadd.f32 %v26, %v34
  %36 = vrot.lane.b32.xlu0 %v12, 126
  %v37 = vpop.permute.xlu0 %36
  %vm39 = vcmask 113664
  %v40 = vsel %vm39, %v37, 0.0
  %v41 = vmul.f32 %v40, 0.1983329
  %v42 = vadd.f32 %v33, %v41
  %v43 = vmul.f32 %v40, -0.1457231
  %v44 = vadd.f32 %v35, %v43
  %v45 = vlaneseq
  %v46 = vshrl.u32 %v45, 7
  %v47 = vadd.s32 %v46, 8
  %v48 = vlaneseq
  %v49 = vand.u32 %v48, 127
  %v50 = vmul.u32 %v49, 2
  %vm51 = vcmp.eq.s32.totalorder %v46, %v50
  %vm52 = vcmp.eq.s32.totalorder %v47, %v50
  %v53 = vsel %vm51, 1.0, 0.0
  %v54 = vsel %vm52, 1.0, 0.0
  %vm55 = vcmask 130048
  %v57 = vsel %vm55, %v44, 0
  %59 = vmatprep.subr.mxu0 0.0
  %60 = vmatpush1.msra.mxu0 %v53
  %61 = vmatprep.subr.mxu0 0.0
  %62 = vmatpush1.msra.mxu0 %v54
  %63 = vmatprep.subr.mxu0 0.0
  %64 = vmatpush1.msra.mxu0 0.0
  %65 = vmatprep.subr.mxu0 0.0
  %66 = vmatpush1.msra.mxu0 0.0
  %67 = vmatprep.subr.mxu0 0.0
  %68 = vmatpush1.msra.mxu0 0.0
  %69 = vmatprep.subr.mxu0 0.0
  %70 = vmatpush1.msra.mxu0 0.0
  %71 = vmatprep.subr.mxu0 0.0
  %72 = vmatpush1.msra.mxu0 0.0
  %73 = vmatprep.subr.mxu0 0.0
  %74 = vmatpush1.msra.mxu0 0.0
  %75 = vmatprep.subr.mxu0 0.0
  %76 = vmatpush1.msra.mxu0 0.0
  %77 = vmatprep.subr.mxu0 0.0
  %78 = vmatpush1.msra.mxu0 0.0
  %79 = vmatprep.subr.mxu0 0.0
  %80 = vmatpush1.msra.mxu0 0.0
  %81 = vmatprep.subr.mxu0 0.0
  %82 = vmatpush1.msra.mxu0 0.0
  %83 = vmatprep.subr.mxu0 0.0
  %84 = vmatpush1.msra.mxu0 0.0
  %85 = vmatprep.subr.mxu0 0.0
  %86 = vmatpush1.msra.mxu0 0.0
  %87 = vmatprep.subr.mxu0 0.0
  %88 = vmatpush1.msra.mxu0 0.0
  %89 = vmatprep.subr.mxu0 0.0
  %90 = vmatpush1.msra.mxu0 0.0
  %91 = vmatprep.subr.mxu0 0.0
  %92 = vmatpush1.msra.mxu0 0.0
  %93 = vmatprep.subr.mxu0 0.0
  %94 = vmatpush1.msra.mxu0 0.0
  %95 = vmatprep.subr.mxu0 0.0
  %96 = vmatpush1.msra.mxu0 0.0
  %97 = vmatprep.subr.mxu0 0.0
  %98 = vmatpush1.msra.mxu0 0.0
  %99 = vmatprep.subr.mxu0 0.0
  %100 = vmatpush1.msra.mxu0 0.0
  %101 = vmatprep.subr.mxu0 0.0
  %102 = vmatpush1.msra.mxu0 0.0
  %103 = vmatprep.subr.mxu0 0.0
  %104 = vmatpush1.msra.mxu0 0.0
  %105 = vmatprep.subr.mxu0 0.0
  %106 = vmatpush1.msra.mxu0 0.0
  %107 = vmatprep.subr.mxu0 0.0
  %108 = vmatpush1.msra.mxu0 0.0
  %109 = vmatprep.subr.mxu0 0.0
  %110 = vmatpush1.msra.mxu0 0.0
  %111 = vmatprep.subr.mxu0 0.0
  %112 = vmatpush1.msra.mxu0 0.0
  %113 = vmatprep.subr.mxu0 0.0
  %114 = vmatpush1.msra.mxu0 0.0
  %115 = vmatprep.subr.mxu0 0.0
  %116 = vmatpush1.msra.mxu0 0.0
  %117 = vmatprep.subr.mxu0 0.0
  %118 = vmatpush1.msra.mxu0 0.0
  %119 = vmatprep.subr.mxu0 0.0
  %120 = vmatpush1.msra.mxu0 0.0
  %121 = vmatprep.subr.mxu0 0.0
  %122 = vmatpush1.msra.mxu0 0.0
  %123 = vmatprep.mubr.f32.mxu0 0.0
  %v124 = vand.u32 %v57, 4294901760
  %v125 = vsub.f32 %v57, %v124
  %v126 = vand.u32 %v125, 4294901760
  %v127 = vsub.f32 %v125, %v126
  %v128 = vand.u32 %v127, 4294901760
  %129 = vmatmul.mubr.f32.gmra.mrb[0].mxu0 %v128
  %v130 = vpop.f32.mrb[0].mxu0
  %v131 = vadd.f32 0.0, %v130
  %v132 = vpop.f32.mrb[0].mxu0
  %133 = vdwg.mxu0
  %134 = vmatprep.subr.mxu0 0.0
  %v135 = vsub.f32 %v53, %v53
  %v136 = vand.u32 %v135, 4294901760
  %v137 = vsub.f32 %v135, %v136
  %v138 = vand.u32 %v137, 4294901760
  %139 = vmatpush1.msra.mxu0 %v138
  %140 = vmatprep.subr.mxu0 0.0
  %v141 = vsub.f32 %v54, %v54
  %v142 = vand.u32 %v141, 4294901760
  %v143 = vsub.f32 %v141, %v142
  %v144 = vand.u32 %v143, 4294901760
  %145 = vmatpush1.msra.mxu0 %v144
  %146 = vmatprep.subr.mxu0 0.0
  %147 = vmatpush1.msra.mxu0 0.0
  %148 = vmatprep.subr.mxu0 0.0
  %149 = vmatpush1.msra.mxu0 0.0
  %150 = vmatprep.subr.mxu0 0.0
  %151 = vmatpush1.msra.mxu0 0.0
  %152 = vmatprep.subr.mxu0 0.0
  %153 = vmatpush1.msra.mxu0 0.0
  %154 = vmatprep.subr.mxu0 0.0
  %155 = vmatpush1.msra.mxu0 0.0
  %156 = vmatprep.subr.mxu0 0.0
  %157 = vmatpush1.msra.mxu0 0.0
  %158 = vmatprep.subr.mxu0 0.0
  %159 = vmatpush1.msra.mxu0 0.0
  %160 = vmatprep.subr.mxu0 0.0
  %161 = vmatpush1.msra.mxu0 0.0
  %162 = vmatprep.subr.mxu0 0.0
  %163 = vmatpush1.msra.mxu0 0.0
  %164 = vmatprep.subr.mxu0 0.0
  %165 = vmatpush1.msra.mxu0 0.0
  %166 = vmatprep.subr.mxu0 0.0
  %167 = vmatpush1.msra.mxu0 0.0
  %168 = vmatprep.subr.mxu0 0.0
  %169 = vmatpush1.msra.mxu0 0.0
  %170 = vmatprep.subr.mxu0 0.0
  %171 = vmatpush1.msra.mxu0 0.0
  %172 = vmatprep.subr.mxu0 0.0
  %173 = vmatpush1.msra.mxu0 0.0
  %174 = vmatprep.subr.mxu0 0.0
  %175 = vmatpush1.msra.mxu0 0.0
  %176 = vmatprep.subr.mxu0 0.0
  %177 = vmatpush1.msra.mxu0 0.0
  %178 = vmatprep.subr.mxu0 0.0
  %179 = vmatpush1.msra.mxu0 0.0
  %180 = vmatprep.subr.mxu0 0.0
  %181 = vmatpush1.msra.mxu0 0.0
  %182 = vmatprep.subr.mxu0 0.0
  %183 = vmatpush1.msra.mxu0 0.0
  %184 = vmatprep.subr.mxu0 0.0
  %185 = vmatpush1.msra.mxu0 0.0
  %186 = vmatprep.subr.mxu0 0.0
  %187 = vmatpush1.msra.mxu0 0.0
  %188 = vmatprep.subr.mxu0 0.0
  %189 = vmatpush1.msra.mxu0 0.0
  %190 = vmatprep.subr.mxu0 0.0
  %191 = vmatpush1.msra.mxu0 0.0
  %192 = vmatprep.subr.mxu0 0.0
  %193 = vmatpush1.msra.mxu0 0.0
  %194 = vmatprep.subr.mxu0 0.0
  %195 = vmatpush1.msra.mxu0 0.0
  %196 = vmatprep.subr.mxu0 0.0
  %197 = vmatpush1.msra.mxu0 0.0
  %198 = vmatprep.subr.mxu0 0.0
  %199 = vmatpush1.msra.mxu0 0.0
  %200 = vmatprep.subr.mxu0 0.0
  %201 = vmatpush1.msra.mxu0 0.0
  %202 = vmatprep.subr.mxu0 0.0
  %203 = vmatpush1.msra.mxu0 0.0
  %204 = vmatprep.subr.mxu0 0.0
  %205 = vmatpush1.msra.mxu0 0.0
  %206 = vmatprep.mubr.f32.mxu0 0.0
  %v207 = vand.u32 %v57, 4294901760
  %208 = vmatmul.mubr.f32.gmra.mrb[0].mxu0 %v207
  %v209 = vpop.f32.mrb[0].mxu0
  %v210 = vadd.f32 %v131, %v209
  %v211 = vpop.f32.mrb[0].mxu0
  %212 = vdwg.mxu0
  %213 = vmatprep.subr.mxu0 0.0
  %v214 = vsub.f32 %v53, %v53
  %215 = vmatpush1.msra.mxu0 %v214
  %216 = vmatprep.subr.mxu0 0.0
  %v217 = vsub.f32 %v54, %v54
  %218 = vmatpush1.msra.mxu0 %v217
  %219 = vmatprep.subr.mxu0 0.0
  %220 = vmatpush1.msra.mxu0 0.0
  %221 = vmatprep.subr.mxu0 0.0
  %222 = vmatpush1.msra.mxu0 0.0
  %223 = vmatprep.subr.mxu0 0.0
  %224 = vmatpush1.msra.mxu0 0.0
  %225 = vmatprep.subr.mxu0 0.0
  %226 = vmatpush1.msra.mxu0 0.0
  %227 = vmatprep.subr.mxu0 0.0
  %228 = vmatpush1.msra.mxu0 0.0
  %229 = vmatprep.subr.mxu0 0.0
  %230 = vmatpush1.msra.mxu0 0.0
  %231 = vmatprep.subr.mxu0 0.0
  %232 = vmatpush1.msra.mxu0 0.0
  %233 = vmatprep.subr.mxu0 0.0
  %234 = vmatpush1.msra.mxu0 0.0
  %235 = vmatprep.subr.mxu0 0.0
  %236 = vmatpush1.msra.mxu0 0.0
  %237 = vmatprep.subr.mxu0 0.0
  %238 = vmatpush1.msra.mxu0 0.0
  %239 = vmatprep.subr.mxu0 0.0
  %240 = vmatpush1.msra.mxu0 0.0
  %241 = vmatprep.subr.mxu0 0.0
  %242 = vmatpush1.msra.mxu0 0.0
  %243 = vmatprep.subr.mxu0 0.0
  %244 = vmatpush1.msra.mxu0 0.0
  %245 = vmatprep.subr.mxu0 0.0
  %246 = vmatpush1.msra.mxu0 0.0
  %247 = vmatprep.subr.mxu0 0.0
  %248 = vmatpush1.msra.mxu0 0.0
  %249 = vmatprep.subr.mxu0 0.0
  %250 = vmatpush1.msra.mxu0 0.0
  %251 = vmatprep.subr.mxu0 0.0
  %252 = vmatpush1.msra.mxu0 0.0
  %253 = vmatprep.subr.mxu0 0.0
  %254 = vmatpush1.msra.mxu0 0.0
  %255 = vmatprep.subr.mxu0 0.0
  %256 = vmatpush1.msra.mxu0 0.0
  %257 = vmatprep.subr.mxu0 0.0
  %258 = vmatpush1.msra.mxu0 0.0
  %259 = vmatprep.subr.mxu0 0.0
  %260 = vmatpush1.msra.mxu0 0.0
  %261 = vmatprep.subr.mxu0 0.0
  %262 = vmatpush1.msra.mxu0 0.0
  %263 = vmatprep.subr.mxu0 0.0
  %264 = vmatpush1.msra.mxu0 0.0
  %265 = vmatprep.subr.mxu0 0.0
  %266 = vmatpush1.msra.mxu0 0.0
  %267 = vmatprep.subr.mxu0 0.0
  %268 = vmatpush1.msra.mxu0 0.0
  %269 = vmatprep.subr.mxu0 0.0
  %270 = vmatpush1.msra.mxu0 0.0
  %271 = vmatprep.subr.mxu0 0.0
  %272 = vmatpush1.msra.mxu0 0.0
  %273 = vmatprep.subr.mxu0 0.0
  %274 = vmatpush1.msra.mxu0 0.0
  %275 = vmatprep.subr.mxu0 0.0
  %276 = vmatpush1.msra.mxu0 0.0
  %277 = vmatprep.subr.mxu0 0.0
  %278 = vmatpush1.msra.mxu0 0.0
  %279 = vmatprep.mubr.f32.mxu0 0.0
  %v280 = vand.u32 %v57, 4294901760
  %v281 = vsub.f32 %v57, %v280
  %282 = vmatmul.mubr.f32.gmra.mrb[0].mxu0 %v281
  %v283 = vpop.f32.mrb[0].mxu0
  %v284 = vadd.f32 %v210, %v283
  %v285 = vpop.f32.mrb[0].mxu0
  %286 = vdwg.mxu0
  %287 = vmatprep.subr.mxu0 0.0
  %288 = vmatpush1.msra.mxu0 %v53
  %289 = vmatprep.subr.mxu0 0.0
  %290 = vmatpush1.msra.mxu0 %v54
  %291 = vmatprep.subr.mxu0 0.0
  %292 = vmatpush1.msra.mxu0 0.0
  %293 = vmatprep.subr.mxu0 0.0
  %294 = vmatpush1.msra.mxu0 0.0
  %295 = vmatprep.subr.mxu0 0.0
  %296 = vmatpush1.msra.mxu0 0.0
  %297 = vmatprep.subr.mxu0 0.0
  %298 = vmatpush1.msra.mxu0 0.0
  %299 = vmatprep.subr.mxu0 0.0
  %300 = vmatpush1.msra.mxu0 0.0
  %301 = vmatprep.subr.mxu0 0.0
  %302 = vmatpush1.msra.mxu0 0.0
  %303 = vmatprep.subr.mxu0 0.0
  %304 = vmatpush1.msra.mxu0 0.0
  %305 = vmatprep.subr.mxu0 0.0
  %306 = vmatpush1.msra.mxu0 0.0
  %307 = vmatprep.subr.mxu0 0.0
  %308 = vmatpush1.msra.mxu0 0.0
  %309 = vmatprep.subr.mxu0 0.0
  %310 = vmatpush1.msra.mxu0 0.0
  %311 = vmatprep.subr.mxu0 0.0
  %312 = vmatpush1.msra.mxu0 0.0
  %313 = vmatprep.subr.mxu0 0.0
  %314 = vmatpush1.msra.mxu0 0.0
  %315 = vmatprep.subr.mxu0 0.0
  %316 = vmatpush1.msra.mxu0 0.0
  %317 = vmatprep.subr.mxu0 0.0
  %318 = vmatpush1.msra.mxu0 0.0
  %319 = vmatprep.subr.mxu0 0.0
  %320 = vmatpush1.msra.mxu0 0.0
  %321 = vmatprep.subr.mxu0 0.0
  %322 = vmatpush1.msra.mxu0 0.0
  %323 = vmatprep.subr.mxu0 0.0
  %324 = vmatpush1.msra.mxu0 0.0
  %325 = vmatprep.subr.mxu0 0.0
  %326 = vmatpush1.msra.mxu0 0.0
  %327 = vmatprep.subr.mxu0 0.0
  %328 = vmatpush1.msra.mxu0 0.0
  %329 = vmatprep.subr.mxu0 0.0
  %330 = vmatpush1.msra.mxu0 0.0
  %331 = vmatprep.subr.mxu0 0.0
  %332 = vmatpush1.msra.mxu0 0.0
  %333 = vmatprep.subr.mxu0 0.0
  %334 = vmatpush1.msra.mxu0 0.0
  %335 = vmatprep.subr.mxu0 0.0
  %336 = vmatpush1.msra.mxu0 0.0
  %337 = vmatprep.subr.mxu0 0.0
  %338 = vmatpush1.msra.mxu0 0.0
  %339 = vmatprep.subr.mxu0 0.0
  %340 = vmatpush1.msra.mxu0 0.0
  %341 = vmatprep.subr.mxu0 0.0
  %342 = vmatpush1.msra.mxu0 0.0
  %343 = vmatprep.subr.mxu0 0.0
  %344 = vmatpush1.msra.mxu0 0.0
  %345 = vmatprep.subr.mxu0 0.0
  %346 = vmatpush1.msra.mxu0 0.0
  %347 = vmatprep.subr.mxu0 0.0
  %348 = vmatpush1.msra.mxu0 0.0
  %349 = vmatprep.subr.mxu0 0.0
  %350 = vmatpush1.msra.mxu0 0.0
  %351 = vmatprep.mubr.f32.mxu0 0.0
  %v352 = vand.u32 %v57, 4294901760
  %v353 = vsub.f32 %v57, %v352
  %v354 = vand.u32 %v353, 4294901760
  %355 = vmatmul.mubr.f32.gmra.mrb[0].mxu0 %v354
  %v356 = vpop.f32.mrb[0].mxu0
  %v357 = vadd.f32 %v284, %v356
  %v358 = vpop.f32.mrb[0].mxu0
  %359 = vdwg.mxu0
  %360 = vmatprep.subr.mxu0 0.0
  %v361 = vsub.f32 %v53, %v53
  %v362 = vand.u32 %v361, 4294901760
  %363 = vmatpush1.msra.mxu0 %v362
  %364 = vmatprep.subr.mxu0 0.0
  %v365 = vsub.f32 %v54, %v54
  %v366 = vand.u32 %v365, 4294901760
  %367 = vmatpush1.msra.mxu0 %v366
  %368 = vmatprep.subr.mxu0 0.0
  %369 = vmatpush1.msra.mxu0 0.0
  %370 = vmatprep.subr.mxu0 0.0
  %371 = vmatpush1.msra.mxu0 0.0
  %372 = vmatprep.subr.mxu0 0.0
  %373 = vmatpush1.msra.mxu0 0.0
  %374 = vmatprep.subr.mxu0 0.0
  %375 = vmatpush1.msra.mxu0 0.0
  %376 = vmatprep.subr.mxu0 0.0
  %377 = vmatpush1.msra.mxu0 0.0
  %378 = vmatprep.subr.mxu0 0.0
  %379 = vmatpush1.msra.mxu0 0.0
  %380 = vmatprep.subr.mxu0 0.0
  %381 = vmatpush1.msra.mxu0 0.0
  %382 = vmatprep.subr.mxu0 0.0
  %383 = vmatpush1.msra.mxu0 0.0
  %384 = vmatprep.subr.mxu0 0.0
  %385 = vmatpush1.msra.mxu0 0.0
  %386 = vmatprep.subr.mxu0 0.0
  %387 = vmatpush1.msra.mxu0 0.0
  %388 = vmatprep.subr.mxu0 0.0
  %389 = vmatpush1.msra.mxu0 0.0
  %390 = vmatprep.subr.mxu0 0.0
  %391 = vmatpush1.msra.mxu0 0.0
  %392 = vmatprep.subr.mxu0 0.0
  %393 = vmatpush1.msra.mxu0 0.0
  %394 = vmatprep.subr.mxu0 0.0
  %395 = vmatpush1.msra.mxu0 0.0
  %396 = vmatprep.subr.mxu0 0.0
  %397 = vmatpush1.msra.mxu0 0.0
  %398 = vmatprep.subr.mxu0 0.0
  %399 = vmatpush1.msra.mxu0 0.0
  %400 = vmatprep.subr.mxu0 0.0
  %401 = vmatpush1.msra.mxu0 0.0
  %402 = vmatprep.subr.mxu0 0.0
  %403 = vmatpush1.msra.mxu0 0.0
  %404 = vmatprep.subr.mxu0 0.0
  %405 = vmatpush1.msra.mxu0 0.0
  %406 = vmatprep.subr.mxu0 0.0
  %407 = vmatpush1.msra.mxu0 0.0
  %408 = vmatprep.subr.mxu0 0.0
  %409 = vmatpush1.msra.mxu0 0.0
  %410 = vmatprep.subr.mxu0 0.0
  %411 = vmatpush1.msra.mxu0 0.0
  %412 = vmatprep.subr.mxu0 0.0
  %413 = vmatpush1.msra.mxu0 0.0
  %414 = vmatprep.subr.mxu0 0.0
  %415 = vmatpush1.msra.mxu0 0.0
  %416 = vmatprep.subr.mxu0 0.0
  %417 = vmatpush1.msra.mxu0 0.0
  %418 = vmatprep.subr.mxu0 0.0
  %419 = vmatpush1.msra.mxu0 0.0
  %420 = vmatprep.subr.mxu0 0.0
  %421 = vmatpush1.msra.mxu0 0.0
  %422 = vmatprep.subr.mxu0 0.0
  %423 = vmatpush1.msra.mxu0 0.0
  %424 = vmatprep.subr.mxu0 0.0
  %425 = vmatpush1.msra.mxu0 0.0
  %426 = vmatprep.subr.mxu0 0.0
  %427 = vmatpush1.msra.mxu0 0.0
  %428 = vmatprep.mubr.f32.mxu0 0.0
  %v429 = vand.u32 %v57, 4294901760
  %430 = vmatmul.mubr.f32.gmra.mrb[0].mxu0 %v429
  %v431 = vpop.f32.mrb[0].mxu0
  %v432 = vadd.f32 %v357, %v431
  %v433 = vpop.f32.mrb[0].mxu0
  %434 = vdwg.mxu0
  %435 = vmatprep.subr.mxu0 0.0
  %436 = vmatpush1.msra.mxu0 %v53
  %437 = vmatprep.subr.mxu0 0.0
  %438 = vmatpush1.msra.mxu0 %v54
  %439 = vmatprep.subr.mxu0 0.0
  %440 = vmatpush1.msra.mxu0 0.0
  %441 = vmatprep.subr.mxu0 0.0
  %442 = vmatpush1.msra.mxu0 0.0
  %443 = vmatprep.subr.mxu0 0.0
  %444 = vmatpush1.msra.mxu0 0.0
  %445 = vmatprep.subr.mxu0 0.0
  %446 = vmatpush1.msra.mxu0 0.0
  %447 = vmatprep.subr.mxu0 0.0
  %448 = vmatpush1.msra.mxu0 0.0
  %449 = vmatprep.subr.mxu0 0.0
  %450 = vmatpush1.msra.mxu0 0.0
  %451 = vmatprep.subr.mxu0 0.0
  %452 = vmatpush1.msra.mxu0 0.0
  %453 = vmatprep.subr.mxu0 0.0
  %454 = vmatpush1.msra.mxu0 0.0
  %455 = vmatprep.subr.mxu0 0.0
  %456 = vmatpush1.msra.mxu0 0.0
  %457 = vmatprep.subr.mxu0 0.0
  %458 = vmatpush1.msra.mxu0 0.0
  %459 = vmatprep.subr.mxu0 0.0
  %460 = vmatpush1.msra.mxu0 0.0
  %461 = vmatprep.subr.mxu0 0.0
  %462 = vmatpush1.msra.mxu0 0.0
  %463 = vmatprep.subr.mxu0 0.0
  %464 = vmatpush1.msra.mxu0 0.0
  %465 = vmatprep.subr.mxu0 0.0
  %466 = vmatpush1.msra.mxu0 0.0
  %467 = vmatprep.subr.mxu0 0.0
  %468 = vmatpush1.msra.mxu0 0.0
  %469 = vmatprep.subr.mxu0 0.0
  %470 = vmatpush1.msra.mxu0 0.0
  %471 = vmatprep.subr.mxu0 0.0
  %472 = vmatpush1.msra.mxu0 0.0
  %473 = vmatprep.subr.mxu0 0.0
  %474 = vmatpush1.msra.mxu0 0.0
  %475 = vmatprep.subr.mxu0 0.0
  %476 = vmatpush1.msra.mxu0 0.0
  %477 = vmatprep.subr.mxu0 0.0
  %478 = vmatpush1.msra.mxu0 0.0
  %479 = vmatprep.subr.mxu0 0.0
  %480 = vmatpush1.msra.mxu0 0.0
  %481 = vmatprep.subr.mxu0 0.0
  %482 = vmatpush1.msra.mxu0 0.0
  %483 = vmatprep.subr.mxu0 0.0
  %484 = vmatpush1.msra.mxu0 0.0
  %485 = vmatprep.subr.mxu0 0.0
  %486 = vmatpush1.msra.mxu0 0.0
  %487 = vmatprep.subr.mxu0 0.0
  %488 = vmatpush1.msra.mxu0 0.0
  %489 = vmatprep.subr.mxu0 0.0
  %490 = vmatpush1.msra.mxu0 0.0
  %491 = vmatprep.subr.mxu0 0.0
  %492 = vmatpush1.msra.mxu0 0.0
  %493 = vmatprep.subr.mxu0 0.0
  %494 = vmatpush1.msra.mxu0 0.0
  %495 = vmatprep.subr.mxu0 0.0
  %496 = vmatpush1.msra.mxu0 0.0
  %497 = vmatprep.subr.mxu0 0.0
  %498 = vmatpush1.msra.mxu0 0.0
  %499 = vmatprep.mubr.f32.mxu0 0.0
  %v500 = vand.u32 %v57, 4294901760
  %501 = vmatmul.mubr.f32.gmra.mrb[0].mxu0 %v500
  %v502 = vpop.f32.mrb[0].mxu0
  %v503 = vadd.f32 %v432, %v502
  %v504 = vpop.f32.mrb[0].mxu0
  %505 = vdwg.mxu0
  %vm506 = vcmask 64512
  %507 = vst.msk [vmem:[%s1] sm:$0xff] %vm506, %v503
  %v508 = vmul.f32 %v42, -0.23845637
  %v509 = vadd.f32 %v508, 0.113571405
  %v510 = vmul.f32 %v42, -0.060652852
  %v511 = vadd.f32 %v510, -0.41089046
  %513 = vrot.lane.b32.xlu0 %v42, 2
  %v514 = vpop.permute.xlu0 %513
  %vm516 = vcmask 15360
  %v517 = vsel %vm516, 0.0, %v514
  %v518 = vmul.f32 %v517, -0.1004082
  %v519 = vadd.f32 %v509, %v518
  %v520 = vmul.f32 %v517, 0.057189465
  %v521 = vadd.f32 %v511, %v520
  %522 = vrot.lane.b32.xlu0 %v42, 126
  %v523 = vpop.permute.xlu0 %522
  %v525 = vsel %vm39, %v523, 0.0
  %v526 = vmul.f32 %v525, -0.253397
  %v527 = vadd.f32 %v519, %v526
  %v528 = vmul.f32 %v525, -0.46398616
  %v529 = vadd.f32 %v521, %v528
  %530 = vrot.lane.b32.xlu0 %v42, 124
  %v531 = vpop.permute.xlu0 %530
  %vm533 = vcmask 97280
  %v534 = vsel %vm533, %v531, 0.0
  %v535 = vmul.f32 %v534, 0.022388697
  %v536 = vadd.f32 %v527, %v535
  %v537 = vmul.f32 %v534, 0.20735145
  %v538 = vadd.f32 %v529, %v537
  %v539 = vmul.u32 %v49, 4
  %vm540 = vcmp.eq.s32.totalorder %v46, %v539
  %vm541 = vcmp.eq.s32.totalorder %v47, %v539
  %v542 = vsel %vm540, 1.0, 0.0
  %v543 = vsel %vm541, 1.0, 0.0
  %v545 = vsel %vm55, %v538, 0
  %547 = vmatprep.subr.mxu0 0.0
  %548 = vmatpush1.msra.mxu0 %v542
  %549 = vmatprep.subr.mxu0 0.0
  %550 = vmatpush1.msra.mxu0 %v543
  %551 = vmatprep.subr.mxu0 0.0
  %552 = vmatpush1.msra.mxu0 0.0
  %553 = vmatprep.subr.mxu0 0.0
  %554 = vmatpush1.msra.mxu0 0.0
  %555 = vmatprep.subr.mxu0 0.0
  %556 = vmatpush1.msra.mxu0 0.0
  %557 = vmatprep.subr.mxu0 0.0
  %558 = vmatpush1.msra.mxu0 0.0
  %559 = vmatprep.subr.mxu0 0.0
  %560 = vmatpush1.msra.mxu0 0.0
  %561 = vmatprep.subr.mxu0 0.0
  %562 = vmatpush1.msra.mxu0 0.0
  %563 = vmatprep.subr.mxu0 0.0
  %564 = vmatpush1.msra.mxu0 0.0
  %565 = vmatprep.subr.mxu0 0.0
  %566 = vmatpush1.msra.mxu0 0.0
  %567 = vmatprep.subr.mxu0 0.0
  %568 = vmatpush1.msra.mxu0 0.0
  %569 = vmatprep.subr.mxu0 0.0
  %570 = vmatpush1.msra.mxu0 0.0
  %571 = vmatprep.subr.mxu0 0.0
  %572 = vmatpush1.msra.mxu0 0.0
  %573 = vmatprep.subr.mxu0 0.0
  %574 = vmatpush1.msra.mxu0 0.0
  %575 = vmatprep.subr.mxu0 0.0
  %576 = vmatpush1.msra.mxu0 0.0
  %577 = vmatprep.subr.mxu0 0.0
  %578 = vmatpush1.msra.mxu0 0.0
  %579 = vmatprep.subr.mxu0 0.0
  %580 = vmatpush1.msra.mxu0 0.0
  %581 = vmatprep.subr.mxu0 0.0
  %582 = vmatpush1.msra.mxu0 0.0
  %583 = vmatprep.subr.mxu0 0.0
  %584 = vmatpush1.msra.mxu0 0.0
  %585 = vmatprep.subr.mxu0 0.0
  %586 = vmatpush1.msra.mxu0 0.0
  %587 = vmatprep.subr.mxu0 0.0
  %588 = vmatpush1.msra.mxu0 0.0
  %589 = vmatprep.subr.mxu0 0.0
  %590 = vmatpush1.msra.mxu0 0.0
  %591 = vmatprep.subr.mxu0 0.0
  %592 = vmatpush1.msra.mxu0 0.0
  %593 = vmatprep.subr.mxu0 0.0
  %594 = vmatpush1.msra.mxu0 0.0
  %595 = vmatprep.subr.mxu0 0.0
  %596 = vmatpush1.msra.mxu0 0.0
  %597 = vmatprep.subr.mxu0 0.0
  %598 = vmatpush1.msra.mxu0 0.0
  %599 = vmatprep.subr.mxu0 0.0
  %600 = vmatpush1.msra.mxu0 0.0
  %601 = vmatprep.subr.mxu0 0.0
  %602 = vmatpush1.msra.mxu0 0.0
  %603 = vmatprep.subr.mxu0 0.0
  %604 = vmatpush1.msra.mxu0 0.0
  %605 = vmatprep.subr.mxu0 0.0
  %606 = vmatpush1.msra.mxu0 0.0
  %607 = vmatprep.subr.mxu0 0.0
  %608 = vmatpush1.msra.mxu0 0.0
  %609 = vmatprep.subr.mxu0 0.0
  %610 = vmatpush1.msra.mxu0 0.0
  %611 = vmatprep.mubr.f32.mxu0 0.0
  %v612 = vand.u32 %v545, 4294901760
  %v613 = vsub.f32 %v545, %v612
  %v614 = vand.u32 %v613, 4294901760
  %v615 = vsub.f32 %v613, %v614
  %v616 = vand.u32 %v615, 4294901760
  %617 = vmatmul.mubr.f32.gmra.mrb[0].mxu0 %v616
  %v618 = vpop.f32.mrb[0].mxu0
  %v619 = vadd.f32 0.0, %v618
  %v620 = vpop.f32.mrb[0].mxu0
  %621 = vdwg.mxu0
  %622 = vmatprep.subr.mxu0 0.0
  %v623 = vsub.f32 %v542, %v542
  %v624 = vand.u32 %v623, 4294901760
  %v625 = vsub.f32 %v623, %v624
  %v626 = vand.u32 %v625, 4294901760
  %627 = vmatpush1.msra.mxu0 %v626
  %628 = vmatprep.subr.mxu0 0.0
  %v629 = vsub.f32 %v543, %v543
  %v630 = vand.u32 %v629, 4294901760
  %v631 = vsub.f32 %v629, %v630
  %v632 = vand.u32 %v631, 4294901760
  %633 = vmatpush1.msra.mxu0 %v632
  %634 = vmatprep.subr.mxu0 0.0
  %635 = vmatpush1.msra.mxu0 0.0
  %636 = vmatprep.subr.mxu0 0.0
  %637 = vmatpush1.msra.mxu0 0.0
  %638 = vmatprep.subr.mxu0 0.0
  %639 = vmatpush1.msra.mxu0 0.0
  %640 = vmatprep.subr.mxu0 0.0
  %641 = vmatpush1.msra.mxu0 0.0
  %642 = vmatprep.subr.mxu0 0.0
  %643 = vmatpush1.msra.mxu0 0.0
  %644 = vmatprep.subr.mxu0 0.0
  %645 = vmatpush1.msra.mxu0 0.0
  %646 = vmatprep.subr.mxu0 0.0
  %647 = vmatpush1.msra.mxu0 0.0
  %648 = vmatprep.subr.mxu0 0.0
  %649 = vmatpush1.msra.mxu0 0.0
  %650 = vmatprep.subr.mxu0 0.0
  %651 = vmatpush1.msra.mxu0 0.0
  %652 = vmatprep.subr.mxu0 0.0
  %653 = vmatpush1.msra.mxu0 0.0
  %654 = vmatprep.subr.mxu0 0.0
  %655 = vmatpush1.msra.mxu0 0.0
  %656 = vmatprep.subr.mxu0 0.0
  %657 = vmatpush1.msra.mxu0 0.0
  %658 = vmatprep.subr.mxu0 0.0
  %659 = vmatpush1.msra.mxu0 0.0
  %660 = vmatprep.subr.mxu0 0.0
  %661 = vmatpush1.msra.mxu0 0.0
  %662 = vmatprep.subr.mxu0 0.0
  %663 = vmatpush1.msra.mxu0 0.0
  %664 = vmatprep.subr.mxu0 0.0
  %665 = vmatpush1.msra.mxu0 0.0
  %666 = vmatprep.subr.mxu0 0.0
  %667 = vmatpush1.msra.mxu0 0.0
  %668 = vmatprep.subr.mxu0 0.0
  %669 = vmatpush1.msra.mxu0 0.0
  %670 = vmatprep.subr.mxu0 0.0
  %671 = vmatpush1.msra.mxu0 0.0
  %672 = vmatprep.subr.mxu0 0.0
  %673 = vmatpush1.msra.mxu0 0.0
  %674 = vmatprep.subr.mxu0 0.0
  %675 = vmatpush1.msra.mxu0 0.0
  %676 = vmatprep.subr.mxu0 0.0
  %677 = vmatpush1.msra.mxu0 0.0
  %678 = vmatprep.subr.mxu0 0.0
  %679 = vmatpush1.msra.mxu0 0.0
  %680 = vmatprep.subr.mxu0 0.0
  %681 = vmatpush1.msra.mxu0 0.0
  %682 = vmatprep.subr.mxu0 0.0
  %683 = vmatpush1.msra.mxu0 0.0
  %684 = vmatprep.subr.mxu0 0.0
  %685 = vmatpush1.msra.mxu0 0.0
  %686 = vmatprep.subr.mxu0 0.0
  %687 = vmatpush1.msra.mxu0 0.0
  %688 = vmatprep.subr.mxu0 0.0
  %689 = vmatpush1.msra.mxu0 0.0
  %690 = vmatprep.subr.mxu0 0.0
  %691 = vmatpush1.msra.mxu0 0.0
  %692 = vmatprep.subr.mxu0 0.0
  %693 = vmatpush1.msra.mxu0 0.0
  %694 = vmatprep.mubr.f32.mxu0 0.0
  %v695 = vand.u32 %v545, 4294901760
  %696 = vmatmul.mubr.f32.gmra.mrb[0].mxu0 %v695
  %v697 = vpop.f32.mrb[0].mxu0
  %v698 = vadd.f32 %v619, %v697
  %v699 = vpop.f32.mrb[0].mxu0
  %700 = vdwg.mxu0
  %701 = vmatprep.subr.mxu0 0.0
  %v702 = vsub.f32 %v542, %v542
  %703 = vmatpush1.msra.mxu0 %v702
  %704 = vmatprep.subr.mxu0 0.0
  %v705 = vsub.f32 %v543, %v543
  %706 = vmatpush1.msra.mxu0 %v705
  %707 = vmatprep.subr.mxu0 0.0
  %708 = vmatpush1.msra.mxu0 0.0
  %709 = vmatprep.subr.mxu0 0.0
  %710 = vmatpush1.msra.mxu0 0.0
  %711 = vmatprep.subr.mxu0 0.0
  %712 = vmatpush1.msra.mxu0 0.0
  %713 = vmatprep.subr.mxu0 0.0
  %714 = vmatpush1.msra.mxu0 0.0
  %715 = vmatprep.subr.mxu0 0.0
  %716 = vmatpush1.msra.mxu0 0.0
  %717 = vmatprep.subr.mxu0 0.0
  %718 = vmatpush1.msra.mxu0 0.0
  %719 = vmatprep.subr.mxu0 0.0
  %720 = vmatpush1.msra.mxu0 0.0
  %721 = vmatprep.subr.mxu0 0.0
  %722 = vmatpush1.msra.mxu0 0.0
  %723 = vmatprep.subr.mxu0 0.0
  %724 = vmatpush1.msra.mxu0 0.0
  %725 = vmatprep.subr.mxu0 0.0
  %726 = vmatpush1.msra.mxu0 0.0
  %727 = vmatprep.subr.mxu0 0.0
  %728 = vmatpush1.msra.mxu0 0.0
  %729 = vmatprep.subr.mxu0 0.0
  %730 = vmatpush1.msra.mxu0 0.0
  %731 = vmatprep.subr.mxu0 0.0
  %732 = vmatpush1.msra.mxu0 0.0
  %733 = vmatprep.subr.mxu0 0.0
  %734 = vmatpush1.msra.mxu0 0.0
  %735 = vmatprep.subr.mxu0 0.0
  %736 = vmatpush1.msra.mxu0 0.0
  %737 = vmatprep.subr.mxu0 0.0
  %738 = vmatpush1.msra.mxu0 0.0
  %739 = vmatprep.subr.mxu0 0.0
  %740 = vmatpush1.msra.mxu0 0.0
  %741 = vmatprep.subr.mxu0 0.0
  %742 = vmatpush1.msra.mxu0 0.0
  %743 = vmatprep.subr.mxu0 0.0
  %744 = vmatpush1.msra.mxu0 0.0
  %745 = vmatprep.subr.mxu0 0.0
  %746 = vmatpush1.msra.mxu0 0.0
  %747 = vmatprep.subr.mxu0 0.0
  %748 = vmatpush1.msra.mxu0 0.0
  %749 = vmatprep.subr.mxu0 0.0
  %750 = vmatpush1.msra.mxu0 0.0
  %751 = vmatprep.subr.mxu0 0.0
  %752 = vmatpush1.msra.mxu0 0.0
  %753 = vmatprep.subr.mxu0 0.0
  %754 = vmatpush1.msra.mxu0 0.0
  %755 = vmatprep.subr.mxu0 0.0
  %756 = vmatpush1.msra.mxu0 0.0
  %757 = vmatprep.subr.mxu0 0.0
  %758 = vmatpush1.msra.mxu0 0.0
  %759 = vmatprep.subr.mxu0 0.0
  %760 = vmatpush1.msra.mxu0 0.0
  %761 = vmatprep.subr.mxu0 0.0
  %762 = vmatpush1.msra.mxu0 0.0
  %763 = vmatprep.subr.mxu0 0.0
  %764 = vmatpush1.msra.mxu0 0.0
  %765 = vmatprep.subr.mxu0 0.0
  %766 = vmatpush1.msra.mxu0 0.0
  %767 = vmatprep.mubr.f32.mxu0 0.0
  %v768 = vand.u32 %v545, 4294901760
  %v769 = vsub.f32 %v545, %v768
  %770 = vmatmul.mubr.f32.gmra.mrb[0].mxu0 %v769
  %v771 = vpop.f32.mrb[0].mxu0
  %v772 = vadd.f32 %v698, %v771
  %v773 = vpop.f32.mrb[0].mxu0
  %774 = vdwg.mxu0
  %775 = vmatprep.subr.mxu0 0.0
  %776 = vmatpush1.msra.mxu0 %v542
  %777 = vmatprep.subr.mxu0 0.0
  %778 = vmatpush1.msra.mxu0 %v543
  %779 = vmatprep.subr.mxu0 0.0
  %780 = vmatpush1.msra.mxu0 0.0
  %781 = vmatprep.subr.mxu0 0.0
  %782 = vmatpush1.msra.mxu0 0.0
  %783 = vmatprep.subr.mxu0 0.0
  %784 = vmatpush1.msra.mxu0 0.0
  %785 = vmatprep.subr.mxu0 0.0
  %786 = vmatpush1.msra.mxu0 0.0
  %787 = vmatprep.subr.mxu0 0.0
  %788 = vmatpush1.msra.mxu0 0.0
  %789 = vmatprep.subr.mxu0 0.0
  %790 = vmatpush1.msra.mxu0 0.0
  %791 = vmatprep.subr.mxu0 0.0
  %792 = vmatpush1.msra.mxu0 0.0
  %793 = vmatprep.subr.mxu0 0.0
  %794 = vmatpush1.msra.mxu0 0.0
  %795 = vmatprep.subr.mxu0 0.0
  %796 = vmatpush1.msra.mxu0 0.0
  %797 = vmatprep.subr.mxu0 0.0
  %798 = vmatpush1.msra.mxu0 0.0
  %799 = vmatprep.subr.mxu0 0.0
  %800 = vmatpush1.msra.mxu0 0.0
  %801 = vmatprep.subr.mxu0 0.0
  %802 = vmatpush1.msra.mxu0 0.0
  %803 = vmatprep.subr.mxu0 0.0
  %804 = vmatpush1.msra.mxu0 0.0
  %805 = vmatprep.subr.mxu0 0.0
  %806 = vmatpush1.msra.mxu0 0.0
  %807 = vmatprep.subr.mxu0 0.0
  %808 = vmatpush1.msra.mxu0 0.0
  %809 = vmatprep.subr.mxu0 0.0
  %810 = vmatpush1.msra.mxu0 0.0
  %811 = vmatprep.subr.mxu0 0.0
  %812 = vmatpush1.msra.mxu0 0.0
  %813 = vmatprep.subr.mxu0 0.0
  %814 = vmatpush1.msra.mxu0 0.0
  %815 = vmatprep.subr.mxu0 0.0
  %816 = vmatpush1.msra.mxu0 0.0
  %817 = vmatprep.subr.mxu0 0.0
  %818 = vmatpush1.msra.mxu0 0.0
  %819 = vmatprep.subr.mxu0 0.0
  %820 = vmatpush1.msra.mxu0 0.0
  %821 = vmatprep.subr.mxu0 0.0
  %822 = vmatpush1.msra.mxu0 0.0
  %823 = vmatprep.subr.mxu0 0.0
  %824 = vmatpush1.msra.mxu0 0.0
  %825 = vmatprep.subr.mxu0 0.0
  %826 = vmatpush1.msra.mxu0 0.0
  %827 = vmatprep.subr.mxu0 0.0
  %828 = vmatpush1.msra.mxu0 0.0
  %829 = vmatprep.subr.mxu0 0.0
  %830 = vmatpush1.msra.mxu0 0.0
  %831 = vmatprep.subr.mxu0 0.0
  %832 = vmatpush1.msra.mxu0 0.0
  %833 = vmatprep.subr.mxu0 0.0
  %834 = vmatpush1.msra.mxu0 0.0
  %835 = vmatprep.subr.mxu0 0.0
  %836 = vmatpush1.msra.mxu0 0.0
  %837 = vmatprep.subr.mxu0 0.0
  %838 = vmatpush1.msra.mxu0 0.0
  %839 = vmatprep.mubr.f32.mxu0 0.0
  %v840 = vand.u32 %v545, 4294901760
  %v841 = vsub.f32 %v545, %v840
  %v842 = vand.u32 %v841, 4294901760
  %843 = vmatmul.mubr.f32.gmra.mrb[0].mxu0 %v842
  %v844 = vpop.f32.mrb[0].mxu0
  %v845 = vadd.f32 %v772, %v844
  %v846 = vpop.f32.mrb[0].mxu0
  %847 = vdwg.mxu0
  %848 = vmatprep.subr.mxu0 0.0
  %v849 = vsub.f32 %v542, %v542
  %v850 = vand.u32 %v849, 4294901760
  %851 = vmatpush1.msra.mxu0 %v850
  %852 = vmatprep.subr.mxu0 0.0
  %v853 = vsub.f32 %v543, %v543
  %v854 = vand.u32 %v853, 4294901760
  %855 = vmatpush1.msra.mxu0 %v854
  %856 = vmatprep.subr.mxu0 0.0
  %857 = vmatpush1.msra.mxu0 0.0
  %858 = vmatprep.subr.mxu0 0.0
  %859 = vmatpush1.msra.mxu0 0.0
  %860 = vmatprep.subr.mxu0 0.0
  %861 = vmatpush1.msra.mxu0 0.0
  %862 = vmatprep.subr.mxu0 0.0
  %863 = vmatpush1.msra.mxu0 0.0
  %864 = vmatprep.subr.mxu0 0.0
  %865 = vmatpush1.msra.mxu0 0.0
  %866 = vmatprep.subr.mxu0 0.0
  %867 = vmatpush1.msra.mxu0 0.0
  %868 = vmatprep.subr.mxu0 0.0
  %869 = vmatpush1.msra.mxu0 0.0
  %870 = vmatprep.subr.mxu0 0.0
  %871 = vmatpush1.msra.mxu0 0.0
  %872 = vmatprep.subr.mxu0 0.0
  %873 = vmatpush1.msra.mxu0 0.0
  %874 = vmatprep.subr.mxu0 0.0
  %875 = vmatpush1.msra.mxu0 0.0
  %876 = vmatprep.subr.mxu0 0.0
  %877 = vmatpush1.msra.mxu0 0.0
  %878 = vmatprep.subr.mxu0 0.0
  %879 = vmatpush1.msra.mxu0 0.0
  %880 = vmatprep.subr.mxu0 0.0
  %881 = vmatpush1.msra.mxu0 0.0
  %882 = vmatprep.subr.mxu0 0.0
  %883 = vmatpush1.msra.mxu0 0.0
  %884 = vmatprep.subr.mxu0 0.0
  %885 = vmatpush1.msra.mxu0 0.0
  %886 = vmatprep.subr.mxu0 0.0
  %887 = vmatpush1.msra.mxu0 0.0
  %888 = vmatprep.subr.mxu0 0.0
  %889 = vmatpush1.msra.mxu0 0.0
  %890 = vmatprep.subr.mxu0 0.0
  %891 = vmatpush1.msra.mxu0 0.0
  %892 = vmatprep.subr.mxu0 0.0
  %893 = vmatpush1.msra.mxu0 0.0
  %894 = vmatprep.subr.mxu0 0.0
  %895 = vmatpush1.msra.mxu0 0.0
  %896 = vmatprep.subr.mxu0 0.0
  %897 = vmatpush1.msra.mxu0 0.0
  %898 = vmatprep.subr.mxu0 0.0
  %899 = vmatpush1.msra.mxu0 0.0
  %900 = vmatprep.subr.mxu0 0.0
  %901 = vmatpush1.msra.mxu0 0.0
  %902 = vmatprep.subr.mxu0 0.0
  %903 = vmatpush1.msra.mxu0 0.0
  %904 = vmatprep.subr.mxu0 0.0
  %905 = vmatpush1.msra.mxu0 0.0
  %906 = vmatprep.subr.mxu0 0.0
  %907 = vmatpush1.msra.mxu0 0.0
  %908 = vmatprep.subr.mxu0 0.0
  %909 = vmatpush1.msra.mxu0 0.0
  %910 = vmatprep.subr.mxu0 0.0
  %911 = vmatpush1.msra.mxu0 0.0
  %912 = vmatprep.subr.mxu0 0.0
  %913 = vmatpush1.msra.mxu0 0.0
  %914 = vmatprep.subr.mxu0 0.0
  %915 = vmatpush1.msra.mxu0 0.0
  %916 = vmatprep.mubr.f32.mxu0 0.0
  %v917 = vand.u32 %v545, 4294901760
  %918 = vmatmul.mubr.f32.gmra.mrb[0].mxu0 %v917
  %v919 = vpop.f32.mrb[0].mxu0
  %v920 = vadd.f32 %v845, %v919
  %v921 = vpop.f32.mrb[0].mxu0
  %922 = vdwg.mxu0
  %923 = vmatprep.subr.mxu0 0.0
  %924 = vmatpush1.msra.mxu0 %v542
  %925 = vmatprep.subr.mxu0 0.0
  %926 = vmatpush1.msra.mxu0 %v543
  %927 = vmatprep.subr.mxu0 0.0
  %928 = vmatpush1.msra.mxu0 0.0
  %929 = vmatprep.subr.mxu0 0.0
  %930 = vmatpush1.msra.mxu0 0.0
  %931 = vmatprep.subr.mxu0 0.0
  %932 = vmatpush1.msra.mxu0 0.0
  %933 = vmatprep.subr.mxu0 0.0
  %934 = vmatpush1.msra.mxu0 0.0
  %935 = vmatprep.subr.mxu0 0.0
  %936 = vmatpush1.msra.mxu0 0.0
  %937 = vmatprep.subr.mxu0 0.0
  %938 = vmatpush1.msra.mxu0 0.0
  %939 = vmatprep.subr.mxu0 0.0
  %940 = vmatpush1.msra.mxu0 0.0
  %941 = vmatprep.subr.mxu0 0.0
  %942 = vmatpush1.msra.mxu0 0.0
  %943 = vmatprep.subr.mxu0 0.0
  %944 = vmatpush1.msra.mxu0 0.0
  %945 = vmatprep.subr.mxu0 0.0
  %946 = vmatpush1.msra.mxu0 0.0
  %947 = vmatprep.subr.mxu0 0.0
  %948 = vmatpush1.msra.mxu0 0.0
  %949 = vmatprep.subr.mxu0 0.0
  %950 = vmatpush1.msra.mxu0 0.0
  %951 = vmatprep.subr.mxu0 0.0
  %952 = vmatpush1.msra.mxu0 0.0
  %953 = vmatprep.subr.mxu0 0.0
  %954 = vmatpush1.msra.mxu0 0.0
  %955 = vmatprep.subr.mxu0 0.0
  %956 = vmatpush1.msra.mxu0 0.0
  %957 = vmatprep.subr.mxu0 0.0
  %958 = vmatpush1.msra.mxu0 0.0
  %959 = vmatprep.subr.mxu0 0.0
  %960 = vmatpush1.msra.mxu0 0.0
  %961 = vmatprep.subr.mxu0 0.0
  %962 = vmatpush1.msra.mxu0 0.0
  %963 = vmatprep.subr.mxu0 0.0
  %964 = vmatpush1.msra.mxu0 0.0
  %965 = vmatprep.subr.mxu0 0.0
  %966 = vmatpush1.msra.mxu0 0.0
  %967 = vmatprep.subr.mxu0 0.0
  %968 = vmatpush1.msra.mxu0 0.0
  %969 = vmatprep.subr.mxu0 0.0
  %970 = vmatpush1.msra.mxu0 0.0
  %971 = vmatprep.subr.mxu0 0.0
  %972 = vmatpush1.msra.mxu0 0.0
  %973 = vmatprep.subr.mxu0 0.0
  %974 = vmatpush1.msra.mxu0 0.0
  %975 = vmatprep.subr.mxu0 0.0
  %976 = vmatpush1.msra.mxu0 0.0
  %977 = vmatprep.subr.mxu0 0.0
  %978 = vmatpush1.msra.mxu0 0.0
  %979 = vmatprep.subr.mxu0 0.0
  %980 = vmatpush1.msra.mxu0 0.0
  %981 = vmatprep.subr.mxu0 0.0
  %982 = vmatpush1.msra.mxu0 0.0
  %983 = vmatprep.subr.mxu0 0.0
  %984 = vmatpush1.msra.mxu0 0.0
  %985 = vmatprep.subr.mxu0 0.0
  %986 = vmatpush1.msra.mxu0 0.0
  %987 = vmatprep.mubr.f32.mxu0 0.0
  %v988 = vand.u32 %v545, 4294901760
  %989 = vmatmul.mubr.f32.gmra.mrb[0].mxu0 %v988
  %v990 = vpop.f32.mrb[0].mxu0
  %v991 = vadd.f32 %v920, %v990
  %v992 = vpop.f32.mrb[0].mxu0
  %993 = vdwg.mxu0
  %vm994 = vcmask 31744
  %995 = vst.msk [vmem:[%s2] sm:$0xff] %vm994, %v991
  %v996 = vmul.f32 %v536, -0.3919829
  %v997 = vadd.f32 %v996, 0.25332952
  %v998 = vmul.f32 %v536, -0.055036545
  %v999 = vadd.f32 %v998, -0.105764985
  %1001 = vrot.lane.b32.xlu0 %v536, 4
  %v1002 = vpop.permute.xlu0 %1001
  %v1004 = vsel %vm994, 0.0, %v1002
  %v1005 = vmul.f32 %v1004, -0.33512306
  %v1006 = vadd.f32 %v997, %v1005
  %v1007 = vmul.f32 %v1004, -0.47287488
  %v1008 = vadd.f32 %v999, %v1007
  %1009 = vrot.lane.b32.xlu0 %v536, 124
  %v1010 = vpop.permute.xlu0 %1009
  %v1012 = vsel %vm533, %v1010, 0.0
  %v1013 = vmul.f32 %v1012, 0.29591703
  %v1014 = vadd.f32 %v1006, %v1013
  %v1015 = vmul.f32 %v1012, 0.22925973
  %v1016 = vadd.f32 %v1008, %v1015
  %1017 = vrot.lane.b32.xlu0 %v536, 120
  %v1018 = vpop.permute.xlu0 %1017
  %v1020 = vsel %vm506, %v1018, 0.0
  %v1021 = vmul.f32 %v1020, -0.42166924
  %v1022 = vadd.f32 %v1014, %v1021
  %v1023 = vmul.f32 %v1020, -0.31933343
  %v1024 = vadd.f32 %v1016, %v1023
  %v1025 = vmul.u32 %v49, 8
  %vm1026 = vcmp.eq.s32.totalorder %v46, %v1025
  %vm1027 = vcmp.eq.s32.totalorder %v47, %v1025
  %v1028 = vsel %vm1026, 1.0, 0.0
  %v1029 = vsel %vm1027, 1.0, 0.0
  %v1031 = vsel %vm55, %v1024, 0
  %1033 = vmatprep.subr.mxu0 0.0
  %1034 = vmatpush1.msra.mxu0 %v1028
  %1035 = vmatprep.subr.mxu0 0.0
  %1036 = vmatpush1.msra.mxu0 %v1029
  %1037 = vmatprep.subr.mxu0 0.0
  %1038 = vmatpush1.msra.mxu0 0.0
  %1039 = vmatprep.subr.mxu0 0.0
  %1040 = vmatpush1.msra.mxu0 0.0
  %1041 = vmatprep.subr.mxu0 0.0
  %1042 = vmatpush1.msra.mxu0 0.0
  %1043 = vmatprep.subr.mxu0 0.0
  %1044 = vmatpush1.msra.mxu0 0.0
  %1045 = vmatprep.subr.mxu0 0.0
  %1046 = vmatpush1.msra.mxu0 0.0
  %1047 = vmatprep.subr.mxu0 0.0
  %1048 = vmatpush1.msra.mxu0 0.0
  %1049 = vmatprep.subr.mxu0 0.0
  %1050 = vmatpush1.msra.mxu0 0.0
  %1051 = vmatprep.subr.mxu0 0.0
  %1052 = vmatpush1.msra.mxu0 0.0
  %1053 = vmatprep.subr.mxu0 0.0
  %1054 = vmatpush1.msra.mxu0 0.0
  %1055 = vmatprep.subr.mxu0 0.0
  %1056 = vmatpush1.msra.mxu0 0.0
  %1057 = vmatprep.subr.mxu0 0.0
  %1058 = vmatpush1.msra.mxu0 0.0
  %1059 = vmatprep.subr.mxu0 0.0
  %1060 = vmatpush1.msra.mxu0 0.0
  %1061 = vmatprep.subr.mxu0 0.0
  %1062 = vmatpush1.msra.mxu0 0.0
  %1063 = vmatprep.subr.mxu0 0.0
  %1064 = vmatpush1.msra.mxu0 0.0
  %1065 = vmatprep.subr.mxu0 0.0
  %1066 = vmatpush1.msra.mxu0 0.0
  %1067 = vmatprep.subr.mxu0 0.0
  %1068 = vmatpush1.msra.mxu0 0.0
  %1069 = vmatprep.subr.mxu0 0.0
  %1070 = vmatpush1.msra.mxu0 0.0
  %1071 = vmatprep.subr.mxu0 0.0
  %1072 = vmatpush1.msra.mxu0 0.0
  %1073 = vmatprep.subr.mxu0 0.0
  %1074 = vmatpush1.msra.mxu0 0.0
  %1075 = vmatprep.subr.mxu0 0.0
  %1076 = vmatpush1.msra.mxu0 0.0
  %1077 = vmatprep.subr.mxu0 0.0
  %1078 = vmatpush1.msra.mxu0 0.0
  %1079 = vmatprep.subr.mxu0 0.0
  %1080 = vmatpush1.msra.mxu0 0.0
  %1081 = vmatprep.subr.mxu0 0.0
  %1082 = vmatpush1.msra.mxu0 0.0
  %1083 = vmatprep.subr.mxu0 0.0
  %1084 = vmatpush1.msra.mxu0 0.0
  %1085 = vmatprep.subr.mxu0 0.0
  %1086 = vmatpush1.msra.mxu0 0.0
  %1087 = vmatprep.subr.mxu0 0.0
  %1088 = vmatpush1.msra.mxu0 0.0
  %1089 = vmatprep.subr.mxu0 0.0
  %1090 = vmatpush1.msra.mxu0 0.0
  %1091 = vmatprep.subr.mxu0 0.0
  %1092 = vmatpush1.msra.mxu0 0.0
  %1093 = vmatprep.subr.mxu0 0.0
  %1094 = vmatpush1.msra.mxu0 0.0
  %1095 = vmatprep.subr.mxu0 0.0
  %1096 = vmatpush1.msra.mxu0 0.0
  %1097 = vmatprep.mubr.f32.mxu0 0.0
  %v1098 = vand.u32 %v1031, 4294901760
  %v1099 = vsub.f32 %v1031, %v1098
  %v1100 = vand.u32 %v1099, 4294901760
  %v1101 = vsub.f32 %v1099, %v1100
  %v1102 = vand.u32 %v1101, 4294901760
  %1103 = vmatmul.mubr.f32.gmra.mrb[0].mxu0 %v1102
  %v1104 = vpop.f32.mrb[0].mxu0
  %v1105 = vadd.f32 0.0, %v1104
  %v1106 = vpop.f32.mrb[0].mxu0
  %1107 = vdwg.mxu0
  %1108 = vmatprep.subr.mxu0 0.0
  %v1109 = vsub.f32 %v1028, %v1028
  %v1110 = vand.u32 %v1109, 4294901760
  %v1111 = vsub.f32 %v1109, %v1110
  %v1112 = vand.u32 %v1111, 4294901760
  %1113 = vmatpush1.msra.mxu0 %v1112
  %1114 = vmatprep.subr.mxu0 0.0
  %v1115 = vsub.f32 %v1029, %v1029
  %v1116 = vand.u32 %v1115, 4294901760
  %v1117 = vsub.f32 %v1115, %v1116
  %v1118 = vand.u32 %v1117, 4294901760
  %1119 = vmatpush1.msra.mxu0 %v1118
  %1120 = vmatprep.subr.mxu0 0.0
  %1121 = vmatpush1.msra.mxu0 0.0
  %1122 = vmatprep.subr.mxu0 0.0
  %1123 = vmatpush1.msra.mxu0 0.0
  %1124 = vmatprep.subr.mxu0 0.0
  %1125 = vmatpush1.msra.mxu0 0.0
  %1126 = vmatprep.subr.mxu0 0.0
  %1127 = vmatpush1.msra.mxu0 0.0
  %1128 = vmatprep.subr.mxu0 0.0
  %1129 = vmatpush1.msra.mxu0 0.0
  %1130 = vmatprep.subr.mxu0 0.0
  %1131 = vmatpush1.msra.mxu0 0.0
  %1132 = vmatprep.subr.mxu0 0.0
  %1133 = vmatpush1.msra.mxu0 0.0
  %1134 = vmatprep.subr.mxu0 0.0
  %1135 = vmatpush1.msra.mxu0 0.0
  %1136 = vmatprep.subr.mxu0 0.0
  %1137 = vmatpush1.msra.mxu0 0.0
  %1138 = vmatprep.subr.mxu0 0.0
  %1139 = vmatpush1.msra.mxu0 0.0
  %1140 = vmatprep.subr.mxu0 0.0
  %1141 = vmatpush1.msra.mxu0 0.0
  %1142 = vmatprep.subr.mxu0 0.0
  %1143 = vmatpush1.msra.mxu0 0.0
  %1144 = vmatprep.subr.mxu0 0.0
  %1145 = vmatpush1.msra.mxu0 0.0
  %1146 = vmatprep.subr.mxu0 0.0
  %1147 = vmatpush1.msra.mxu0 0.0
  %1148 = vmatprep.subr.mxu0 0.0
  %1149 = vmatpush1.msra.mxu0 0.0
  %1150 = vmatprep.subr.mxu0 0.0
  %1151 = vmatpush1.msra.mxu0 0.0
  %1152 = vmatprep.subr.mxu0 0.0
  %1153 = vmatpush1.msra.mxu0 0.0
  %1154 = vmatprep.subr.mxu0 0.0
  %1155 = vmatpush1.msra.mxu0 0.0
  %1156 = vmatprep.subr.mxu0 0.0
  %1157 = vmatpush1.msra.mxu0 0.0
  %1158 = vmatprep.subr.mxu0 0.0
  %1159 = vmatpush1.msra.mxu0 0.0
  %1160 = vmatprep.subr.mxu0 0.0
  %1161 = vmatpush1.msra.mxu0 0.0
  %1162 = vmatprep.subr.mxu0 0.0
  %1163 = vmatpush1.msra.mxu0 0.0
  %1164 = vmatprep.subr.mxu0 0.0
  %1165 = vmatpush1.msra.mxu0 0.0
  %1166 = vmatprep.subr.mxu0 0.0
  %1167 = vmatpush1.msra.mxu0 0.0
  %1168 = vmatprep.subr.mxu0 0.0
  %1169 = vmatpush1.msra.mxu0 0.0
  %1170 = vmatprep.subr.mxu0 0.0
  %1171 = vmatpush1.msra.mxu0 0.0
  %1172 = vmatprep.subr.mxu0 0.0
  %1173 = vmatpush1.msra.mxu0 0.0
  %1174 = vmatprep.subr.mxu0 0.0
  %1175 = vmatpush1.msra.mxu0 0.0
  %1176 = vmatprep.subr.mxu0 0.0
  %1177 = vmatpush1.msra.mxu0 0.0
  %1178 = vmatprep.subr.mxu0 0.0
  %1179 = vmatpush1.msra.mxu0 0.0
  %1180 = vmatprep.mubr.f32.mxu0 0.0
  %v1181 = vand.u32 %v1031, 4294901760
  %1182 = vmatmul.mubr.f32.gmra.mrb[0].mxu0 %v1181
  %v1183 = vpop.f32.mrb[0].mxu0
  %v1184 = vadd.f32 %v1105, %v1183
  %v1185 = vpop.f32.mrb[0].mxu0
  %1186 = vdwg.mxu0
  %1187 = vmatprep.subr.mxu0 0.0
  %v1188 = vsub.f32 %v1028, %v1028
  %1189 = vmatpush1.msra.mxu0 %v1188
  %1190 = vmatprep.subr.mxu0 0.0
  %v1191 = vsub.f32 %v1029, %v1029
  %1192 = vmatpush1.msra.mxu0 %v1191
  %1193 = vmatprep.subr.mxu0 0.0
  %1194 = vmatpush1.msra.mxu0 0.0
  %1195 = vmatprep.subr.mxu0 0.0
  %1196 = vmatpush1.msra.mxu0 0.0
  %1197 = vmatprep.subr.mxu0 0.0
  %1198 = vmatpush1.msra.mxu0 0.0
  %1199 = vmatprep.subr.mxu0 0.0
  %1200 = vmatpush1.msra.mxu0 0.0
  %1201 = vmatprep.subr.mxu0 0.0
  %1202 = vmatpush1.msra.mxu0 0.0
  %1203 = vmatprep.subr.mxu0 0.0
  %1204 = vmatpush1.msra.mxu0 0.0
  %1205 = vmatprep.subr.mxu0 0.0
  %1206 = vmatpush1.msra.mxu0 0.0
  %1207 = vmatprep.subr.mxu0 0.0
  %1208 = vmatpush1.msra.mxu0 0.0
  %1209 = vmatprep.subr.mxu0 0.0
  %1210 = vmatpush1.msra.mxu0 0.0
  %1211 = vmatprep.subr.mxu0 0.0
  %1212 = vmatpush1.msra.mxu0 0.0
  %1213 = vmatprep.subr.mxu0 0.0
  %1214 = vmatpush1.msra.mxu0 0.0
  %1215 = vmatprep.subr.mxu0 0.0
  %1216 = vmatpush1.msra.mxu0 0.0
  %1217 = vmatprep.subr.mxu0 0.0
  %1218 = vmatpush1.msra.mxu0 0.0
  %1219 = vmatprep.subr.mxu0 0.0
  %1220 = vmatpush1.msra.mxu0 0.0
  %1221 = vmatprep.subr.mxu0 0.0
  %1222 = vmatpush1.msra.mxu0 0.0
  %1223 = vmatprep.subr.mxu0 0.0
  %1224 = vmatpush1.msra.mxu0 0.0
  %1225 = vmatprep.subr.mxu0 0.0
  %1226 = vmatpush1.msra.mxu0 0.0
  %1227 = vmatprep.subr.mxu0 0.0
  %1228 = vmatpush1.msra.mxu0 0.0
  %1229 = vmatprep.subr.mxu0 0.0
  %1230 = vmatpush1.msra.mxu0 0.0
  %1231 = vmatprep.subr.mxu0 0.0
  %1232 = vmatpush1.msra.mxu0 0.0
  %1233 = vmatprep.subr.mxu0 0.0
  %1234 = vmatpush1.msra.mxu0 0.0
  %1235 = vmatprep.subr.mxu0 0.0
  %1236 = vmatpush1.msra.mxu0 0.0
  %1237 = vmatprep.subr.mxu0 0.0
  %1238 = vmatpush1.msra.mxu0 0.0
  %1239 = vmatprep.subr.mxu0 0.0
  %1240 = vmatpush1.msra.mxu0 0.0
  %1241 = vmatprep.subr.mxu0 0.0
  %1242 = vmatpush1.msra.mxu0 0.0
  %1243 = vmatprep.subr.mxu0 0.0
  %1244 = vmatpush1.msra.mxu0 0.0
  %1245 = vmatprep.subr.mxu0 0.0
  %1246 = vmatpush1.msra.mxu0 0.0
  %1247 = vmatprep.subr.mxu0 0.0
  %1248 = vmatpush1.msra.mxu0 0.0
  %1249 = vmatprep.subr.mxu0 0.0
  %1250 = vmatpush1.msra.mxu0 0.0
  %1251 = vmatprep.subr.mxu0 0.0
  %1252 = vmatpush1.msra.mxu0 0.0
  %1253 = vmatprep.mubr.f32.mxu0 0.0
  %v1254 = vand.u32 %v1031, 4294901760
  %v1255 = vsub.f32 %v1031, %v1254
  %1256 = vmatmul.mubr.f32.gmra.mrb[0].mxu0 %v1255
  %v1257 = vpop.f32.mrb[0].mxu0
  %v1258 = vadd.f32 %v1184, %v1257
  %v1259 = vpop.f32.mrb[0].mxu0
  %1260 = vdwg.mxu0
  %1261 = vmatprep.subr.mxu0 0.0
  %1262 = vmatpush1.msra.mxu0 %v1028
  %1263 = vmatprep.subr.mxu0 0.0
  %1264 = vmatpush1.msra.mxu0 %v1029
  %1265 = vmatprep.subr.mxu0 0.0
  %1266 = vmatpush1.msra.mxu0 0.0
  %1267 = vmatprep.subr.mxu0 0.0
  %1268 = vmatpush1.msra.mxu0 0.0
  %1269 = vmatprep.subr.mxu0 0.0
  %1270 = vmatpush1.msra.mxu0 0.0
  %1271 = vmatprep.subr.mxu0 0.0
  %1272 = vmatpush1.msra.mxu0 0.0
  %1273 = vmatprep.subr.mxu0 0.0
  %1274 = vmatpush1.msra.mxu0 0.0
  %1275 = vmatprep.subr.mxu0 0.0
  %1276 = vmatpush1.msra.mxu0 0.0
  %1277 = vmatprep.subr.mxu0 0.0
  %1278 = vmatpush1.msra.mxu0 0.0
  %1279 = vmatprep.subr.mxu0 0.0
  %1280 = vmatpush1.msra.mxu0 0.0
  %1281 = vmatprep.subr.mxu0 0.0
  %1282 = vmatpush1.msra.mxu0 0.0
  %1283 = vmatprep.subr.mxu0 0.0
  %1284 = vmatpush1.msra.mxu0 0.0
  %1285 = vmatprep.subr.mxu0 0.0
  %1286 = vmatpush1.msra.mxu0 0.0
  %1287 = vmatprep.subr.mxu0 0.0
  %1288 = vmatpush1.msra.mxu0 0.0
  %1289 = vmatprep.subr.mxu0 0.0
  %1290 = vmatpush1.msra.mxu0 0.0
  %1291 = vmatprep.subr.mxu0 0.0
  %1292 = vmatpush1.msra.mxu0 0.0
  %1293 = vmatprep.subr.mxu0 0.0
  %1294 = vmatpush1.msra.mxu0 0.0
  %1295 = vmatprep.subr.mxu0 0.0
  %1296 = vmatpush1.msra.mxu0 0.0
  %1297 = vmatprep.subr.mxu0 0.0
  %1298 = vmatpush1.msra.mxu0 0.0
  %1299 = vmatprep.subr.mxu0 0.0
  %1300 = vmatpush1.msra.mxu0 0.0
  %1301 = vmatprep.subr.mxu0 0.0
  %1302 = vmatpush1.msra.mxu0 0.0
  %1303 = vmatprep.subr.mxu0 0.0
  %1304 = vmatpush1.msra.mxu0 0.0
  %1305 = vmatprep.subr.mxu0 0.0
  %1306 = vmatpush1.msra.mxu0 0.0
  %1307 = vmatprep.subr.mxu0 0.0
  %1308 = vmatpush1.msra.mxu0 0.0
  %1309 = vmatprep.subr.mxu0 0.0
  %1310 = vmatpush1.msra.mxu0 0.0
  %1311 = vmatprep.subr.mxu0 0.0
  %1312 = vmatpush1.msra.mxu0 0.0
  %1313 = vmatprep.subr.mxu0 0.0
  %1314 = vmatpush1.msra.mxu0 0.0
  %1315 = vmatprep.subr.mxu0 0.0
  %1316 = vmatpush1.msra.mxu0 0.0
  %1317 = vmatprep.subr.mxu0 0.0
  %1318 = vmatpush1.msra.mxu0 0.0
  %1319 = vmatprep.subr.mxu0 0.0
  %1320 = vmatpush1.msra.mxu0 0.0
  %1321 = vmatprep.subr.mxu0 0.0
  %1322 = vmatpush1.msra.mxu0 0.0
  %1323 = vmatprep.subr.mxu0 0.0
  %1324 = vmatpush1.msra.mxu0 0.0
  %1325 = vmatprep.mubr.f32.mxu0 0.0
  %v1326 = vand.u32 %v1031, 4294901760
  %v1327 = vsub.f32 %v1031, %v1326
  %v1328 = vand.u32 %v1327, 4294901760
  %1329 = vmatmul.mubr.f32.gmra.mrb[0].mxu0 %v1328
  %v1330 = vpop.f32.mrb[0].mxu0
  %v1331 = vadd.f32 %v1258, %v1330
  %v1332 = vpop.f32.mrb[0].mxu0
  %1333 = vdwg.mxu0
  %1334 = vmatprep.subr.mxu0 0.0
  %v1335 = vsub.f32 %v1028, %v1028
  %v1336 = vand.u32 %v1335, 4294901760
  %1337 = vmatpush1.msra.mxu0 %v1336
  %1338 = vmatprep.subr.mxu0 0.0
  %v1339 = vsub.f32 %v1029, %v1029
  %v1340 = vand.u32 %v1339, 4294901760
  %1341 = vmatpush1.msra.mxu0 %v1340
  %1342 = vmatprep.subr.mxu0 0.0
  %1343 = vmatpush1.msra.mxu0 0.0
  %1344 = vmatprep.subr.mxu0 0.0
  %1345 = vmatpush1.msra.mxu0 0.0
  %1346 = vmatprep.subr.mxu0 0.0
  %1347 = vmatpush1.msra.mxu0 0.0
  %1348 = vmatprep.subr.mxu0 0.0
  %1349 = vmatpush1.msra.mxu0 0.0
  %1350 = vmatprep.subr.mxu0 0.0
  %1351 = vmatpush1.msra.mxu0 0.0
  %1352 = vmatprep.subr.mxu0 0.0
  %1353 = vmatpush1.msra.mxu0 0.0
  %1354 = vmatprep.subr.mxu0 0.0
  %1355 = vmatpush1.msra.mxu0 0.0
  %1356 = vmatprep.subr.mxu0 0.0
  %1357 = vmatpush1.msra.mxu0 0.0
  %1358 = vmatprep.subr.mxu0 0.0
  %1359 = vmatpush1.msra.mxu0 0.0
  %1360 = vmatprep.subr.mxu0 0.0
  %1361 = vmatpush1.msra.mxu0 0.0
  %1362 = vmatprep.subr.mxu0 0.0
  %1363 = vmatpush1.msra.mxu0 0.0
  %1364 = vmatprep.subr.mxu0 0.0
  %1365 = vmatpush1.msra.mxu0 0.0
  %1366 = vmatprep.subr.mxu0 0.0
  %1367 = vmatpush1.msra.mxu0 0.0
  %1368 = vmatprep.subr.mxu0 0.0
  %1369 = vmatpush1.msra.mxu0 0.0
  %1370 = vmatprep.subr.mxu0 0.0
  %1371 = vmatpush1.msra.mxu0 0.0
  %1372 = vmatprep.subr.mxu0 0.0
  %1373 = vmatpush1.msra.mxu0 0.0
  %1374 = vmatprep.subr.mxu0 0.0
  %1375 = vmatpush1.msra.mxu0 0.0
  %1376 = vmatprep.subr.mxu0 0.0
  %1377 = vmatpush1.msra.mxu0 0.0
  %1378 = vmatprep.subr.mxu0 0.0
  %1379 = vmatpush1.msra.mxu0 0.0
  %1380 = vmatprep.subr.mxu0 0.0
  %1381 = vmatpush1.msra.mxu0 0.0
  %1382 = vmatprep.subr.mxu0 0.0
  %1383 = vmatpush1.msra.mxu0 0.0
  %1384 = vmatprep.subr.mxu0 0.0
  %1385 = vmatpush1.msra.mxu0 0.0
  %1386 = vmatprep.subr.mxu0 0.0
  %1387 = vmatpush1.msra.mxu0 0.0
  %1388 = vmatprep.subr.mxu0 0.0
  %1389 = vmatpush1.msra.mxu0 0.0
  %1390 = vmatprep.subr.mxu0 0.0
  %1391 = vmatpush1.msra.mxu0 0.0
  %1392 = vmatprep.subr.mxu0 0.0
  %1393 = vmatpush1.msra.mxu0 0.0
  %1394 = vmatprep.subr.mxu0 0.0
  %1395 = vmatpush1.msra.mxu0 0.0
  %1396 = vmatprep.subr.mxu0 0.0
  %1397 = vmatpush1.msra.mxu0 0.0
  %1398 = vmatprep.subr.mxu0 0.0
  %1399 = vmatpush1.msra.mxu0 0.0
  %1400 = vmatprep.subr.mxu0 0.0
  %1401 = vmatpush1.msra.mxu0 0.0
  %1402 = vmatprep.mubr.f32.mxu0 0.0
  %v1403 = vand.u32 %v1031, 4294901760
  %1404 = vmatmul.mubr.f32.gmra.mrb[0].mxu0 %v1403
  %v1405 = vpop.f32.mrb[0].mxu0
  %v1406 = vadd.f32 %v1331, %v1405
  %v1407 = vpop.f32.mrb[0].mxu0
  %1408 = vdwg.mxu0
  %1409 = vmatprep.subr.mxu0 0.0
  %1410 = vmatpush1.msra.mxu0 %v1028
  %1411 = vmatprep.subr.mxu0 0.0
  %1412 = vmatpush1.msra.mxu0 %v1029
  %1413 = vmatprep.subr.mxu0 0.0
  %1414 = vmatpush1.msra.mxu0 0.0
  %1415 = vmatprep.subr.mxu0 0.0
  %1416 = vmatpush1.msra.mxu0 0.0
  %1417 = vmatprep.subr.mxu0 0.0
  %1418 = vmatpush1.msra.mxu0 0.0
  %1419 = vmatprep.subr.mxu0 0.0
  %1420 = vmatpush1.msra.mxu0 0.0
  %1421 = vmatprep.subr.mxu0 0.0
  %1422 = vmatpush1.msra.mxu0 0.0
  %1423 = vmatprep.subr.mxu0 0.0
  %1424 = vmatpush1.msra.mxu0 0.0
  %1425 = vmatprep.subr.mxu0 0.0
  %1426 = vmatpush1.msra.mxu0 0.0
  %1427 = vmatprep.subr.mxu0 0.0
  %1428 = vmatpush1.msra.mxu0 0.0
  %1429 = vmatprep.subr.mxu0 0.0
  %1430 = vmatpush1.msra.mxu0 0.0
  %1431 = vmatprep.subr.mxu0 0.0
  %1432 = vmatpush1.msra.mxu0 0.0
  %1433 = vmatprep.subr.mxu0 0.0
  %1434 = vmatpush1.msra.mxu0 0.0
  %1435 = vmatprep.subr.mxu0 0.0
  %1436 = vmatpush1.msra.mxu0 0.0
  %1437 = vmatprep.subr.mxu0 0.0
  %1438 = vmatpush1.msra.mxu0 0.0
  %1439 = vmatprep.subr.mxu0 0.0
  %1440 = vmatpush1.msra.mxu0 0.0
  %1441 = vmatprep.subr.mxu0 0.0
  %1442 = vmatpush1.msra.mxu0 0.0
  %1443 = vmatprep.subr.mxu0 0.0
  %1444 = vmatpush1.msra.mxu0 0.0
  %1445 = vmatprep.subr.mxu0 0.0
  %1446 = vmatpush1.msra.mxu0 0.0
  %1447 = vmatprep.subr.mxu0 0.0
  %1448 = vmatpush1.msra.mxu0 0.0
  %1449 = vmatprep.subr.mxu0 0.0
  %1450 = vmatpush1.msra.mxu0 0.0
  %1451 = vmatprep.subr.mxu0 0.0
  %1452 = vmatpush1.msra.mxu0 0.0
  %1453 = vmatprep.subr.mxu0 0.0
  %1454 = vmatpush1.msra.mxu0 0.0
  %1455 = vmatprep.subr.mxu0 0.0
  %1456 = vmatpush1.msra.mxu0 0.0
  %1457 = vmatprep.subr.mxu0 0.0
  %1458 = vmatpush1.msra.mxu0 0.0
  %1459 = vmatprep.subr.mxu0 0.0
  %1460 = vmatpush1.msra.mxu0 0.0
  %1461 = vmatprep.subr.mxu0 0.0
  %1462 = vmatpush1.msra.mxu0 0.0
  %1463 = vmatprep.subr.mxu0 0.0
  %1464 = vmatpush1.msra.mxu0 0.0
  %1465 = vmatprep.subr.mxu0 0.0
  %1466 = vmatpush1.msra.mxu0 0.0
  %1467 = vmatprep.subr.mxu0 0.0
  %1468 = vmatpush1.msra.mxu0 0.0
  %1469 = vmatprep.subr.mxu0 0.0
  %1470 = vmatpush1.msra.mxu0 0.0
  %1471 = vmatprep.subr.mxu0 0.0
  %1472 = vmatpush1.msra.mxu0 0.0
  %1473 = vmatprep.mubr.f32.mxu0 0.0
  %v1474 = vand.u32 %v1031, 4294901760
  %1475 = vmatmul.mubr.f32.gmra.mrb[0].mxu0 %v1474
  %v1476 = vpop.f32.mrb[0].mxu0
  %v1477 = vadd.f32 %v1406, %v1476
  %v1478 = vpop.f32.mrb[0].mxu0
  %1479 = vdwg.mxu0
  %1480 = vst.msk [vmem:[%s3] sm:$0xff] %vm516, %v1477
  %v1482 = vsel %vm55, %v1022, 0
  %1484 = vmatprep.subr.mxu0 0.0
  %1485 = vmatpush1.msra.mxu0 %v1028
  %1486 = vmatprep.subr.mxu0 0.0
  %1487 = vmatpush1.msra.mxu0 %v1029
  %1488 = vmatprep.subr.mxu0 0.0
  %1489 = vmatpush1.msra.mxu0 0.0
  %1490 = vmatprep.subr.mxu0 0.0
  %1491 = vmatpush1.msra.mxu0 0.0
  %1492 = vmatprep.subr.mxu0 0.0
  %1493 = vmatpush1.msra.mxu0 0.0
  %1494 = vmatprep.subr.mxu0 0.0
  %1495 = vmatpush1.msra.mxu0 0.0
  %1496 = vmatprep.subr.mxu0 0.0
  %1497 = vmatpush1.msra.mxu0 0.0
  %1498 = vmatprep.subr.mxu0 0.0
  %1499 = vmatpush1.msra.mxu0 0.0
  %1500 = vmatprep.subr.mxu0 0.0
  %1501 = vmatpush1.msra.mxu0 0.0
  %1502 = vmatprep.subr.mxu0 0.0
  %1503 = vmatpush1.msra.mxu0 0.0
  %1504 = vmatprep.subr.mxu0 0.0
  %1505 = vmatpush1.msra.mxu0 0.0
  %1506 = vmatprep.subr.mxu0 0.0
  %1507 = vmatpush1.msra.mxu0 0.0
  %1508 = vmatprep.subr.mxu0 0.0
  %1509 = vmatpush1.msra.mxu0 0.0
  %1510 = vmatprep.subr.mxu0 0.0
  %1511 = vmatpush1.msra.mxu0 0.0
  %1512 = vmatprep.subr.mxu0 0.0
  %1513 = vmatpush1.msra.mxu0 0.0
  %1514 = vmatprep.subr.mxu0 0.0
  %1515 = vmatpush1.msra.mxu0 0.0
  %1516 = vmatprep.subr.mxu0 0.0
  %1517 = vmatpush1.msra.mxu0 0.0
  %1518 = vmatprep.subr.mxu0 0.0
  %1519 = vmatpush1.msra.mxu0 0.0
  %1520 = vmatprep.subr.mxu0 0.0
  %1521 = vmatpush1.msra.mxu0 0.0
  %1522 = vmatprep.subr.mxu0 0.0
  %1523 = vmatpush1.msra.mxu0 0.0
  %1524 = vmatprep.subr.mxu0 0.0
  %1525 = vmatpush1.msra.mxu0 0.0
  %1526 = vmatprep.subr.mxu0 0.0
  %1527 = vmatpush1.msra.mxu0 0.0
  %1528 = vmatprep.subr.mxu0 0.0
  %1529 = vmatpush1.msra.mxu0 0.0
  %1530 = vmatprep.subr.mxu0 0.0
  %1531 = vmatpush1.msra.mxu0 0.0
  %1532 = vmatprep.subr.mxu0 0.0
  %1533 = vmatpush1.msra.mxu0 0.0
  %1534 = vmatprep.subr.mxu0 0.0
  %1535 = vmatpush1.msra.mxu0 0.0
  %1536 = vmatprep.subr.mxu0 0.0
  %1537 = vmatpush1.msra.mxu0 0.0
  %1538 = vmatprep.subr.mxu0 0.0
  %1539 = vmatpush1.msra.mxu0 0.0
  %1540 = vmatprep.subr.mxu0 0.0
  %1541 = vmatpush1.msra.mxu0 0.0
  %1542 = vmatprep.subr.mxu0 0.0
  %1543 = vmatpush1.msra.mxu0 0.0
  %1544 = vmatprep.subr.mxu0 0.0
  %1545 = vmatpush1.msra.mxu0 0.0
  %1546 = vmatprep.subr.mxu0 0.0
  %1547 = vmatpush1.msra.mxu0 0.0
  %1548 = vmatprep.mubr.f32.mxu0 0.0
  %v1549 = vand.u32 %v1482, 4294901760
  %v1550 = vsub.f32 %v1482, %v1549
  %v1551 = vand.u32 %v1550, 4294901760
  %v1552 = vsub.f32 %v1550, %v1551
  %v1553 = vand.u32 %v1552, 4294901760
  %1554 = vmatmul.mubr.f32.gmra.mrb[0].mxu0 %v1553
  %v1555 = vpop.f32.mrb[0].mxu0
  %v1556 = vadd.f32 0.0, %v1555
  %v1557 = vpop.f32.mrb[0].mxu0
  %1558 = vdwg.mxu0
  %1559 = vmatprep.subr.mxu0 0.0
  %v1560 = vsub.f32 %v1028, %v1028
  %v1561 = vand.u32 %v1560, 4294901760
  %v1562 = vsub.f32 %v1560, %v1561
  %v1563 = vand.u32 %v1562, 4294901760
  %1564 = vmatpush1.msra.mxu0 %v1563
  %1565 = vmatprep.subr.mxu0 0.0
  %v1566 = vsub.f32 %v1029, %v1029
  %v1567 = vand.u32 %v1566, 4294901760
  %v1568 = vsub.f32 %v1566, %v1567
  %v1569 = vand.u32 %v1568, 4294901760
  %1570 = vmatpush1.msra.mxu0 %v1569
  %1571 = vmatprep.subr.mxu0 0.0
  %1572 = vmatpush1.msra.mxu0 0.0
  %1573 = vmatprep.subr.mxu0 0.0
  %1574 = vmatpush1.msra.mxu0 0.0
  %1575 = vmatprep.subr.mxu0 0.0
  %1576 = vmatpush1.msra.mxu0 0.0
  %1577 = vmatprep.subr.mxu0 0.0
  %1578 = vmatpush1.msra.mxu0 0.0
  %1579 = vmatprep.subr.mxu0 0.0
  %1580 = vmatpush1.msra.mxu0 0.0
  %1581 = vmatprep.subr.mxu0 0.0
  %1582 = vmatpush1.msra.mxu0 0.0
  %1583 = vmatprep.subr.mxu0 0.0
  %1584 = vmatpush1.msra.mxu0 0.0
  %1585 = vmatprep.subr.mxu0 0.0
  %1586 = vmatpush1.msra.mxu0 0.0
  %1587 = vmatprep.subr.mxu0 0.0
  %1588 = vmatpush1.msra.mxu0 0.0
  %1589 = vmatprep.subr.mxu0 0.0
  %1590 = vmatpush1.msra.mxu0 0.0
  %1591 = vmatprep.subr.mxu0 0.0
  %1592 = vmatpush1.msra.mxu0 0.0
  %1593 = vmatprep.subr.mxu0 0.0
  %1594 = vmatpush1.msra.mxu0 0.0
  %1595 = vmatprep.subr.mxu0 0.0
  %1596 = vmatpush1.msra.mxu0 0.0
  %1597 = vmatprep.subr.mxu0 0.0
  %1598 = vmatpush1.msra.mxu0 0.0
  %1599 = vmatprep.subr.mxu0 0.0
  %1600 = vmatpush1.msra.mxu0 0.0
  %1601 = vmatprep.subr.mxu0 0.0
  %1602 = vmatpush1.msra.mxu0 0.0
  %1603 = vmatprep.subr.mxu0 0.0
  %1604 = vmatpush1.msra.mxu0 0.0
  %1605 = vmatprep.subr.mxu0 0.0
  %1606 = vmatpush1.msra.mxu0 0.0
  %1607 = vmatprep.subr.mxu0 0.0
  %1608 = vmatpush1.msra.mxu0 0.0
  %1609 = vmatprep.subr.mxu0 0.0
  %1610 = vmatpush1.msra.mxu0 0.0
  %1611 = vmatprep.subr.mxu0 0.0
  %1612 = vmatpush1.msra.mxu0 0.0
  %1613 = vmatprep.subr.mxu0 0.0
  %1614 = vmatpush1.msra.mxu0 0.0
  %1615 = vmatprep.subr.mxu0 0.0
  %1616 = vmatpush1.msra.mxu0 0.0
  %1617 = vmatprep.subr.mxu0 0.0
  %1618 = vmatpush1.msra.mxu0 0.0
  %1619 = vmatprep.subr.mxu0 0.0
  %1620 = vmatpush1.msra.mxu0 0.0
  %1621 = vmatprep.subr.mxu0 0.0
  %1622 = vmatpush1.msra.mxu0 0.0
  %1623 = vmatprep.subr.mxu0 0.0
  %1624 = vmatpush1.msra.mxu0 0.0
  %1625 = vmatprep.subr.mxu0 0.0
  %1626 = vmatpush1.msra.mxu0 0.0
  %1627 = vmatprep.subr.mxu0 0.0
  %1628 = vmatpush1.msra.mxu0 0.0
  %1629 = vmatprep.subr.mxu0 0.0
  %1630 = vmatpush1.msra.mxu0 0.0
  %1631 = vmatprep.mubr.f32.mxu0 0.0
  %v1632 = vand.u32 %v1482, 4294901760
  %1633 = vmatmul.mubr.f32.gmra.mrb[0].mxu0 %v1632
  %v1634 = vpop.f32.mrb[0].mxu0
  %v1635 = vadd.f32 %v1556, %v1634
  %v1636 = vpop.f32.mrb[0].mxu0
  %1637 = vdwg.mxu0
  %1638 = vmatprep.subr.mxu0 0.0
  %v1639 = vsub.f32 %v1028, %v1028
  %1640 = vmatpush1.msra.mxu0 %v1639
  %1641 = vmatprep.subr.mxu0 0.0
  %v1642 = vsub.f32 %v1029, %v1029
  %1643 = vmatpush1.msra.mxu0 %v1642
  %1644 = vmatprep.subr.mxu0 0.0
  %1645 = vmatpush1.msra.mxu0 0.0
  %1646 = vmatprep.subr.mxu0 0.0
  %1647 = vmatpush1.msra.mxu0 0.0
  %1648 = vmatprep.subr.mxu0 0.0
  %1649 = vmatpush1.msra.mxu0 0.0
  %1650 = vmatprep.subr.mxu0 0.0
  %1651 = vmatpush1.msra.mxu0 0.0
  %1652 = vmatprep.subr.mxu0 0.0
  %1653 = vmatpush1.msra.mxu0 0.0
  %1654 = vmatprep.subr.mxu0 0.0
  %1655 = vmatpush1.msra.mxu0 0.0
  %1656 = vmatprep.subr.mxu0 0.0
  %1657 = vmatpush1.msra.mxu0 0.0
  %1658 = vmatprep.subr.mxu0 0.0
  %1659 = vmatpush1.msra.mxu0 0.0
  %1660 = vmatprep.subr.mxu0 0.0
  %1661 = vmatpush1.msra.mxu0 0.0
  %1662 = vmatprep.subr.mxu0 0.0
  %1663 = vmatpush1.msra.mxu0 0.0
  %1664 = vmatprep.subr.mxu0 0.0
  %1665 = vmatpush1.msra.mxu0 0.0
  %1666 = vmatprep.subr.mxu0 0.0
  %1667 = vmatpush1.msra.mxu0 0.0
  %1668 = vmatprep.subr.mxu0 0.0
  %1669 = vmatpush1.msra.mxu0 0.0
  %1670 = vmatprep.subr.mxu0 0.0
  %1671 = vmatpush1.msra.mxu0 0.0
  %1672 = vmatprep.subr.mxu0 0.0
  %1673 = vmatpush1.msra.mxu0 0.0
  %1674 = vmatprep.subr.mxu0 0.0
  %1675 = vmatpush1.msra.mxu0 0.0
  %1676 = vmatprep.subr.mxu0 0.0
  %1677 = vmatpush1.msra.mxu0 0.0
  %1678 = vmatprep.subr.mxu0 0.0
  %1679 = vmatpush1.msra.mxu0 0.0
  %1680 = vmatprep.subr.mxu0 0.0
  %1681 = vmatpush1.msra.mxu0 0.0
  %1682 = vmatprep.subr.mxu0 0.0
  %1683 = vmatpush1.msra.mxu0 0.0
  %1684 = vmatprep.subr.mxu0 0.0
  %1685 = vmatpush1.msra.mxu0 0.0
  %1686 = vmatprep.subr.mxu0 0.0
  %1687 = vmatpush1.msra.mxu0 0.0
  %1688 = vmatprep.subr.mxu0 0.0
  %1689 = vmatpush1.msra.mxu0 0.0
  %1690 = vmatprep.subr.mxu0 0.0
  %1691 = vmatpush1.msra.mxu0 0.0
  %1692 = vmatprep.subr.mxu0 0.0
  %1693 = vmatpush1.msra.mxu0 0.0
  %1694 = vmatprep.subr.mxu0 0.0
  %1695 = vmatpush1.msra.mxu0 0.0
  %1696 = vmatprep.subr.mxu0 0.0
  %1697 = vmatpush1.msra.mxu0 0.0
  %1698 = vmatprep.subr.mxu0 0.0
  %1699 = vmatpush1.msra.mxu0 0.0
  %1700 = vmatprep.subr.mxu0 0.0
  %1701 = vmatpush1.msra.mxu0 0.0
  %1702 = vmatprep.subr.mxu0 0.0
  %1703 = vmatpush1.msra.mxu0 0.0
  %1704 = vmatprep.mubr.f32.mxu0 0.0
  %v1705 = vand.u32 %v1482, 4294901760
  %v1706 = vsub.f32 %v1482, %v1705
  %1707 = vmatmul.mubr.f32.gmra.mrb[0].mxu0 %v1706
  %v1708 = vpop.f32.mrb[0].mxu0
  %v1709 = vadd.f32 %v1635, %v1708
  %v1710 = vpop.f32.mrb[0].mxu0
  %1711 = vdwg.mxu0
  %1712 = vmatprep.subr.mxu0 0.0
  %1713 = vmatpush1.msra.mxu0 %v1028
  %1714 = vmatprep.subr.mxu0 0.0
  %1715 = vmatpush1.msra.mxu0 %v1029
  %1716 = vmatprep.subr.mxu0 0.0
  %1717 = vmatpush1.msra.mxu0 0.0
  %1718 = vmatprep.subr.mxu0 0.0
  %1719 = vmatpush1.msra.mxu0 0.0
  %1720 = vmatprep.subr.mxu0 0.0
  %1721 = vmatpush1.msra.mxu0 0.0
  %1722 = vmatprep.subr.mxu0 0.0
  %1723 = vmatpush1.msra.mxu0 0.0
  %1724 = vmatprep.subr.mxu0 0.0
  %1725 = vmatpush1.msra.mxu0 0.0
  %1726 = vmatprep.subr.mxu0 0.0
  %1727 = vmatpush1.msra.mxu0 0.0
  %1728 = vmatprep.subr.mxu0 0.0
  %1729 = vmatpush1.msra.mxu0 0.0
  %1730 = vmatprep.subr.mxu0 0.0
  %1731 = vmatpush1.msra.mxu0 0.0
  %1732 = vmatprep.subr.mxu0 0.0
  %1733 = vmatpush1.msra.mxu0 0.0
  %1734 = vmatprep.subr.mxu0 0.0
  %1735 = vmatpush1.msra.mxu0 0.0
  %1736 = vmatprep.subr.mxu0 0.0
  %1737 = vmatpush1.msra.mxu0 0.0
  %1738 = vmatprep.subr.mxu0 0.0
  %1739 = vmatpush1.msra.mxu0 0.0
  %1740 = vmatprep.subr.mxu0 0.0
  %1741 = vmatpush1.msra.mxu0 0.0
  %1742 = vmatprep.subr.mxu0 0.0
  %1743 = vmatpush1.msra.mxu0 0.0
  %1744 = vmatprep.subr.mxu0 0.0
  %1745 = vmatpush1.msra.mxu0 0.0
  %1746 = vmatprep.subr.mxu0 0.0
  %1747 = vmatpush1.msra.mxu0 0.0
  %1748 = vmatprep.subr.mxu0 0.0
  %1749 = vmatpush1.msra.mxu0 0.0
  %1750 = vmatprep.subr.mxu0 0.0
  %1751 = vmatpush1.msra.mxu0 0.0
  %1752 = vmatprep.subr.mxu0 0.0
  %1753 = vmatpush1.msra.mxu0 0.0
  %1754 = vmatprep.subr.mxu0 0.0
  %1755 = vmatpush1.msra.mxu0 0.0
  %1756 = vmatprep.subr.mxu0 0.0
  %1757 = vmatpush1.msra.mxu0 0.0
  %1758 = vmatprep.subr.mxu0 0.0
  %1759 = vmatpush1.msra.mxu0 0.0
  %1760 = vmatprep.subr.mxu0 0.0
  %1761 = vmatpush1.msra.mxu0 0.0
  %1762 = vmatprep.subr.mxu0 0.0
  %1763 = vmatpush1.msra.mxu0 0.0
  %1764 = vmatprep.subr.mxu0 0.0
  %1765 = vmatpush1.msra.mxu0 0.0
  %1766 = vmatprep.subr.mxu0 0.0
  %1767 = vmatpush1.msra.mxu0 0.0
  %1768 = vmatprep.subr.mxu0 0.0
  %1769 = vmatpush1.msra.mxu0 0.0
  %1770 = vmatprep.subr.mxu0 0.0
  %1771 = vmatpush1.msra.mxu0 0.0
  %1772 = vmatprep.subr.mxu0 0.0
  %1773 = vmatpush1.msra.mxu0 0.0
  %1774 = vmatprep.subr.mxu0 0.0
  %1775 = vmatpush1.msra.mxu0 0.0
  %1776 = vmatprep.mubr.f32.mxu0 0.0
  %v1777 = vand.u32 %v1482, 4294901760
  %v1778 = vsub.f32 %v1482, %v1777
  %v1779 = vand.u32 %v1778, 4294901760
  %1780 = vmatmul.mubr.f32.gmra.mrb[0].mxu0 %v1779
  %v1781 = vpop.f32.mrb[0].mxu0
  %v1782 = vadd.f32 %v1709, %v1781
  %v1783 = vpop.f32.mrb[0].mxu0
  %1784 = vdwg.mxu0
  %1785 = vmatprep.subr.mxu0 0.0
  %v1786 = vsub.f32 %v1028, %v1028
  %v1787 = vand.u32 %v1786, 4294901760
  %1788 = vmatpush1.msra.mxu0 %v1787
  %1789 = vmatprep.subr.mxu0 0.0
  %v1790 = vsub.f32 %v1029, %v1029
  %v1791 = vand.u32 %v1790, 4294901760
  %1792 = vmatpush1.msra.mxu0 %v1791
  %1793 = vmatprep.subr.mxu0 0.0
  %1794 = vmatpush1.msra.mxu0 0.0
  %1795 = vmatprep.subr.mxu0 0.0
  %1796 = vmatpush1.msra.mxu0 0.0
  %1797 = vmatprep.subr.mxu0 0.0
  %1798 = vmatpush1.msra.mxu0 0.0
  %1799 = vmatprep.subr.mxu0 0.0
  %1800 = vmatpush1.msra.mxu0 0.0
  %1801 = vmatprep.subr.mxu0 0.0
  %1802 = vmatpush1.msra.mxu0 0.0
  %1803 = vmatprep.subr.mxu0 0.0
  %1804 = vmatpush1.msra.mxu0 0.0
  %1805 = vmatprep.subr.mxu0 0.0
  %1806 = vmatpush1.msra.mxu0 0.0
  %1807 = vmatprep.subr.mxu0 0.0
  %1808 = vmatpush1.msra.mxu0 0.0
  %1809 = vmatprep.subr.mxu0 0.0
  %1810 = vmatpush1.msra.mxu0 0.0
  %1811 = vmatprep.subr.mxu0 0.0
  %1812 = vmatpush1.msra.mxu0 0.0
  %1813 = vmatprep.subr.mxu0 0.0
  %1814 = vmatpush1.msra.mxu0 0.0
  %1815 = vmatprep.subr.mxu0 0.0
  %1816 = vmatpush1.msra.mxu0 0.0
  %1817 = vmatprep.subr.mxu0 0.0
  %1818 = vmatpush1.msra.mxu0 0.0
  %1819 = vmatprep.subr.mxu0 0.0
  %1820 = vmatpush1.msra.mxu0 0.0
  %1821 = vmatprep.subr.mxu0 0.0
  %1822 = vmatpush1.msra.mxu0 0.0
  %1823 = vmatprep.subr.mxu0 0.0
  %1824 = vmatpush1.msra.mxu0 0.0
  %1825 = vmatprep.subr.mxu0 0.0
  %1826 = vmatpush1.msra.mxu0 0.0
  %1827 = vmatprep.subr.mxu0 0.0
  %1828 = vmatpush1.msra.mxu0 0.0
  %1829 = vmatprep.subr.mxu0 0.0
  %1830 = vmatpush1.msra.mxu0 0.0
  %1831 = vmatprep.subr.mxu0 0.0
  %1832 = vmatpush1.msra.mxu0 0.0
  %1833 = vmatprep.subr.mxu0 0.0
  %1834 = vmatpush1.msra.mxu0 0.0
  %1835 = vmatprep.subr.mxu0 0.0
  %1836 = vmatpush1.msra.mxu0 0.0
  %1837 = vmatprep.subr.mxu0 0.0
  %1838 = vmatpush1.msra.mxu0 0.0
  %1839 = vmatprep.subr.mxu0 0.0
  %1840 = vmatpush1.msra.mxu0 0.0
  %1841 = vmatprep.subr.mxu0 0.0
  %1842 = vmatpush1.msra.mxu0 0.0
  %1843 = vmatprep.subr.mxu0 0.0
  %1844 = vmatpush1.msra.mxu0 0.0
  %1845 = vmatprep.subr.mxu0 0.0
  %1846 = vmatpush1.msra.mxu0 0.0
  %1847 = vmatprep.subr.mxu0 0.0
  %1848 = vmatpush1.msra.mxu0 0.0
  %1849 = vmatprep.subr.mxu0 0.0
  %1850 = vmatpush1.msra.mxu0 0.0
  %1851 = vmatprep.subr.mxu0 0.0
  %1852 = vmatpush1.msra.mxu0 0.0
  %1853 = vmatprep.mubr.f32.mxu0 0.0
  %v1854 = vand.u32 %v1482, 4294901760
  %1855 = vmatmul.mubr.f32.gmra.mrb[0].mxu0 %v1854
  %v1856 = vpop.f32.mrb[0].mxu0
  %v1857 = vadd.f32 %v1782, %v1856
  %v1858 = vpop.f32.mrb[0].mxu0
  %1859 = vdwg.mxu0
  %1860 = vmatprep.subr.mxu0 0.0
  %1861 = vmatpush1.msra.mxu0 %v1028
  %1862 = vmatprep.subr.mxu0 0.0
  %1863 = vmatpush1.msra.mxu0 %v1029
  %1864 = vmatprep.subr.mxu0 0.0
  %1865 = vmatpush1.msra.mxu0 0.0
  %1866 = vmatprep.subr.mxu0 0.0
  %1867 = vmatpush1.msra.mxu0 0.0
  %1868 = vmatprep.subr.mxu0 0.0
  %1869 = vmatpush1.msra.mxu0 0.0
  %1870 = vmatprep.subr.mxu0 0.0
  %1871 = vmatpush1.msra.mxu0 0.0
  %1872 = vmatprep.subr.mxu0 0.0
  %1873 = vmatpush1.msra.mxu0 0.0
  %1874 = vmatprep.subr.mxu0 0.0
  %1875 = vmatpush1.msra.mxu0 0.0
  %1876 = vmatprep.subr.mxu0 0.0
  %1877 = vmatpush1.msra.mxu0 0.0
  %1878 = vmatprep.subr.mxu0 0.0
  %1879 = vmatpush1.msra.mxu0 0.0
  %1880 = vmatprep.subr.mxu0 0.0
  %1881 = vmatpush1.msra.mxu0 0.0
  %1882 = vmatprep.subr.mxu0 0.0
  %1883 = vmatpush1.msra.mxu0 0.0
  %1884 = vmatprep.subr.mxu0 0.0
  %1885 = vmatpush1.msra.mxu0 0.0
  %1886 = vmatprep.subr.mxu0 0.0
  %1887 = vmatpush1.msra.mxu0 0.0
  %1888 = vmatprep.subr.mxu0 0.0
  %1889 = vmatpush1.msra.mxu0 0.0
  %1890 = vmatprep.subr.mxu0 0.0
  %1891 = vmatpush1.msra.mxu0 0.0
  %1892 = vmatprep.subr.mxu0 0.0
  %1893 = vmatpush1.msra.mxu0 0.0
  %1894 = vmatprep.subr.mxu0 0.0
  %1895 = vmatpush1.msra.mxu0 0.0
  %1896 = vmatprep.subr.mxu0 0.0
  %1897 = vmatpush1.msra.mxu0 0.0
  %1898 = vmatprep.subr.mxu0 0.0
  %1899 = vmatpush1.msra.mxu0 0.0
  %1900 = vmatprep.subr.mxu0 0.0
  %1901 = vmatpush1.msra.mxu0 0.0
  %1902 = vmatprep.subr.mxu0 0.0
  %1903 = vmatpush1.msra.mxu0 0.0
  %1904 = vmatprep.subr.mxu0 0.0
  %1905 = vmatpush1.msra.mxu0 0.0
  %1906 = vmatprep.subr.mxu0 0.0
  %1907 = vmatpush1.msra.mxu0 0.0
  %1908 = vmatprep.subr.mxu0 0.0
  %1909 = vmatpush1.msra.mxu0 0.0
  %1910 = vmatprep.subr.mxu0 0.0
  %1911 = vmatpush1.msra.mxu0 0.0
  %1912 = vmatprep.subr.mxu0 0.0
  %1913 = vmatpush1.msra.mxu0 0.0
  %1914 = vmatprep.subr.mxu0 0.0
  %1915 = vmatpush1.msra.mxu0 0.0
  %1916 = vmatprep.subr.mxu0 0.0
  %1917 = vmatpush1.msra.mxu0 0.0
  %1918 = vmatprep.subr.mxu0 0.0
  %1919 = vmatpush1.msra.mxu0 0.0
  %1920 = vmatprep.subr.mxu0 0.0
  %1921 = vmatpush1.msra.mxu0 0.0
  %1922 = vmatprep.subr.mxu0 0.0
  %1923 = vmatpush1.msra.mxu0 0.0
  %1924 = vmatprep.mubr.f32.mxu0 0.0
  %v1925 = vand.u32 %v1482, 4294901760
  %1926 = vmatmul.mubr.f32.gmra.mrb[0].mxu0 %v1925
  %v1927 = vpop.f32.mrb[0].mxu0
  %v1928 = vadd.f32 %v1857, %v1927
  %v1929 = vpop.f32.mrb[0].mxu0
  %1930 = vdwg.mxu0
  %1931 = vst.msk [vmem:[%s4] sm:$0xff] %vm516, %v1928
  // Predicated region
  $region6: #{_forward_impl.1} parent=0 // pred_check
    _
  $region7: #{_forward_impl.1} parent=0 // pred_check_branch
    %1933 = sbr.rel (0) target = $region9
  $region8: #{_forward_impl.1} parent=0 // pred_region
    _
  $region9: #{_forward_impl.1} parent=0 // pred_fallthru
    _
  // Predicated region
  $region10: #{_forward_impl.1} parent=0 // pred_check
    _
  $region11: #{_forward_impl.1} parent=0 // pred_check_branch
    %1935 = sbr.rel (0) target = $region13
  $region12: #{_forward_impl.1} parent=0 // pred_region
    _
  $region13: #{_forward_impl.1} parent=0 // pred_fallthru
    _
  // Predicated region
  $region14: #{_forward_impl.1} parent=0 // pred_check
    _
  $region15: #{_forward_impl.1} parent=0 // pred_check_branch
    %1937 = sbr.rel (0) target = $region17
  $region16: #{_forward_impl.1} parent=0 // pred_region
    _
  $region17: #{_forward_impl.1} parent=0 // pred_fallthru
    _
  // Predicated region
  $region18: #{_forward_impl.1} parent=0 // pred_check
    _
  $region19: #{_forward_impl.1} parent=0 // pred_check_branch
    %1939 = sbr.rel (0) target = $region21
  $region20: #{_forward_impl.1} parent=0 // pred_region
    _
  $region21: #{_forward_impl.1} parent=0 // pred_fallthru
    _
  // Predicated region
  $region22: #{_forward_impl.1} parent=0 // pred_check
    _
  $region23: #{_forward_impl.1} parent=0 // pred_check_branch
    %1941 = sbr.rel (0) target = $region25
  $region24: #{_forward_impl.1} parent=0 // pred_region
    _
  $region25: #{_forward_impl.1} parent=0 // pred_fallthru
    _
  // Predicated region
  $region26: #{_forward_impl.1} parent=0 // pred_check
    _
  $region27: #{_forward_impl.1} parent=0 // pred_check_branch
    %1943 = sbr.rel (0) target = $region29
  $region28: #{_forward_impl.1} parent=0 // pred_region
    _
  $region29: #{_forward_impl.1} parent=0 // pred_fallthru
    _
  // Predicated region
  $region30: #{_forward_impl.1} parent=0 // pred_check
    _
  $region31: #{_forward_impl.1} parent=0 // pred_check_branch
    %1945 = sbr.rel (0) target = $region33
  $region32: #{_forward_impl.1} parent=0 // pred_region
    _
  $region33: #{_forward_impl.1} parent=0 // pred_fallthru
    _
  // Predicated region
  $region34: #{_forward_impl.1} parent=0 // pred_check
    _
  $region35: #{_forward_impl.1} parent=0 // pred_check_branch
    %1947 = sbr.rel (0) target = $region37
  $region36: #{_forward_impl.1} parent=0 // pred_region
    _
  $region37: #{_forward_impl.1} parent=0 // pred_fallthru
    _

</llo_original>
